<compile_context>
chip_gen: v7x
topology: tpu7x:2x2x1
jax: 0.10.0
libtpu: 0.0.40
codegen_flags: <defaults>
</compile_context>

<pallas_src>
import math
from functools import partial

import numpy as np
import jax
import jax.numpy as jnp
from jax.experimental import pallas as pl
from jax.experimental.pallas import tpu as pltpu

FILTER_K = 12          # kaiser-sinc anti-aliasing filter taps (BigVGAN default)
RATIO = 2              # up/down ratio inside the anti-aliased activation
KH = FILTER_K // 2     # 6: taps per polyphase branch == x halo (samples/side)
PH = KH // 2           # 3: phase-domain halo of the low-pass branch


# ----------------------------------------------------------------------------
# constant anti-aliasing filter (computed once with numpy)
# ----------------------------------------------------------------------------
def kaiser_sinc_filter1d(cutoff, half_width, kernel_size):
    even = kernel_size % 2 == 0
    half_size = kernel_size // 2
    delta_f = 4.0 * half_width
    A = 2.285 * (half_size - 1) * math.pi * delta_f + 7.95
    if A > 50.0:
        beta = 0.1102 * (A - 8.7)
    elif A >= 21.0:
        beta = 0.5842 * (A - 21.0) ** 0.4 + 0.07886 * (A - 21.0)
    else:
        beta = 0.0
    window = np.kaiser(kernel_size, beta)
    if even:
        time = np.arange(-half_size, half_size) + 0.5
    else:
        time = np.arange(kernel_size) - half_size
    filt = 2.0 * cutoff * window * np.sinc(2.0 * cutoff * time)
    filt = filt / filt.sum()
    return filt.astype(np.float32)


# ----------------------------------------------------------------------------
# per-generation defaults
# ----------------------------------------------------------------------------
def _tpu_defaults():
    """(vmem_limit_bytes, max_tile_t) chosen from the chip's physical VMEM."""
    cap = 64 * 1024 * 1024
    try:
        info = pltpu.get_tpu_info()
        cap = int(getattr(info, "vmem_capacity_bytes", cap))
    except Exception:
        pass
    if cap >= 100 * 1024 * 1024:               # v5e / v6e: 128 MiB VMEM
        return 96 * 1024 * 1024, 1024
    return 48 * 1024 * 1024, 512               # v7x: 64 MiB per TensorCore


def _pick_tile_t(T, max_tile):
    """Largest 128-multiple tile that divides T (capped), else the whole axis."""
    if T % 128 == 0:
        for tt in range(min(max_tile, T), 127, -128):
            if T % tt == 0:
                return tt
    return T


# ----------------------------------------------------------------------------
# fused (anti-aliased Snake -> dilated Conv1d [-> +residual]) Pallas kernel
# ----------------------------------------------------------------------------
def _aa_conv_math(x_ref, halo_ref, alpha_ref, beta_ref, w_ref, b_ref,
                  *, filt, seq_len, tile_t, hw, dilation, kc, e_in):
    """One (time-tile, batch) block:  conv(AA_snake(x))  (pre-bias-added).

    x_ref:    (1, C, TT)          input tile (f32 or bf16)
    halo_ref: (1, 1, C, 2*e_in)   [left e_in | right e_in] edge-clamped context
    alpha/beta: (C, 1)            per-channel Snake parameters (f32)
    w_ref:    (Kc, Cout, Cin)     bf16 conv weights
    b_ref:    (Cout, 1)           f32 bias
    returns   (Cout, TT)          f32 conv output for this tile

    Polyphase identity (K=12, ratio 2), derived from BigVGAN's Activation1d
    (replicate-padded zero-stuffed upsample -> Snake -> replicate-padded
    low-pass -> 2x decimation), with the conv halo `hw` folded in:
        ya_even[r] = snake(2 * sum_j f[2j+1] * xc[r+2-j])
        ya_odd [r] = snake(2 * sum_j f[2j]   * xc[r+3-j])      xc = edge-clamped x
        s[t]       = sum_j f[2j+1]*YE[t+j-2] + sum_j f[2j]*YO[t+j-3]
        y[t]       = sum_k W_k @ s[t + k*d - hw]               (s zero outside [0,T))
    with YE/YO replicate-clamped to ya_even[0] / ya_odd[T-1] at the ends.
    """
    TT = tile_t
    TS = TT + 2 * hw               # snake outputs needed by the conv window
    TE = TS + 2 * PH               # polyphase outputs needed by the low-pass
    f = filt

    t0 = pl.program_id(0) * TT

    halo = halo_ref[0, 0]
    xw = jnp.concatenate([halo[:, :e_in], x_ref[0], halo[:, e_in:]],
                         axis=-1).astype(jnp.float32)          # (C, TT + 2*e_in)

    alpha = alpha_ref[...]
    inv_beta = 1.0 / (beta_ref[...] + 1e-9)

    # polyphase 2x upsample: even/odd output phases at the input rate
    up_e = f[1] * xw[:, 5:5 + TE]
    up_o = f[0] * xw[:, 6:6 + TE]
    for j in range(1, KH):
        up_e = up_e + f[2 * j + 1] * xw[:, 5 - j:5 - j + TE]
        up_o = up_o + f[2 * j] * xw[:, 6 - j:6 - j + TE]
    up_e = 2.0 * up_e
    up_o = 2.0 * up_o

    # Snake: v + sin(alpha*v)^2 / (beta + eps)   (sin rides the EUP slot)
    se = jnp.sin(alpha * up_e)
    so = jnp.sin(alpha * up_o)
    ya_e = up_e + inv_beta * (se * se)
    ya_o = up_o + inv_beta * (so * so)

    # replicate-pad of the (virtual) 2x-rate signal at the sequence ends
    g = (t0 - hw - PH) + jax.lax.broadcasted_iota(jnp.int32, (1, TE), 1)
    lval = ya_e[:, hw + PH:hw + PH + 1]              # == ya_even[0]  (first tile)
    rval = ya_o[:, TE - hw - PH - 1:TE - hw - PH]    # == ya_odd[T-1] (last tile)
    ya_e = jnp.where(g < 0, lval, jnp.where(g >= seq_len, rval, ya_e))
    ya_o = jnp.where(g < 0, lval, jnp.where(g >= seq_len, rval, ya_o))

    # low-pass + 2x decimation folded: only the kept output phase is computed
    s = f[1] * ya_e[:, 1:1 + TS] + f[0] * ya_o[:, 0:TS]
    for j in range(1, KH):
        s = s + f[2 * j + 1] * ya_e[:, j + 1:j + 1 + TS] + f[2 * j] * ya_o[:, j:j + TS]

    # the reference Conv1d zero-pads its input: zero s outside [0, T)
    gs = (t0 - hw) + jax.lax.broadcasted_iota(jnp.int32, (1, TS), 1)
    s = jnp.where((gs >= 0) & (gs < seq_len), s, 0.0)
    s16 = s.astype(jnp.bfloat16)

    # dilated conv as kc accumulated bf16 MXU matmuls (no im2col copy)
    acc = jnp.dot(w_ref[0], s16[:, 0:TT], preferred_element_type=jnp.float32)
    for k in range(1, kc):
        acc = acc + jnp.dot(w_ref[k], s16[:, k * dilation:k * dilation + TT],
                            preferred_element_type=jnp.float32)
    return acc + b_ref[...]


def _store_outputs(acc, y_ref, e_ref, tile_t, e_out):
    y = acc.astype(y_ref.dtype)
    y_ref[0] = y
    # tiny edge sidecar for the *next* consumer's halo: [first e_out | last e_out]
    e_ref[0, 0] = jnp.concatenate([y[:, :e_out], y[:, tile_t - e_out:]], axis=-1)


def _fused_kernel(x_ref, halo_ref, a_ref, bt_ref, w_ref, b_ref, y_ref, e_ref,
                  *, filt, seq_len, tile_t, hw, dilation, kc, e_in, e_out):
    acc = _aa_conv_math(x_ref, halo_ref, a_ref, bt_ref, w_ref, b_ref,
                        filt=filt, seq_len=seq_len, tile_t=tile_t, hw=hw,
                        dilation=dilation, kc=kc, e_in=e_in)
    _store_outputs(acc, y_ref, e_ref, tile_t, e_out)


def _fused_kernel_res(x_ref, halo_ref, a_ref, bt_ref, w_ref, b_ref, res_ref,
                      y_ref, e_ref, *, filt, seq_len, tile_t, hw, dilation, kc,
                      e_in, e_out):
    acc = _aa_conv_math(x_ref, halo_ref, a_ref, bt_ref, w_ref, b_ref,
                        filt=filt, seq_len=seq_len, tile_t=tile_t, hw=hw,
                        dilation=dilation, kc=kc, e_in=e_in)
    acc = acc + res_ref[0]
    _store_outputs(acc, y_ref, e_ref, tile_t, e_out)


# ----------------------------------------------------------------------------
# wrappers
# ----------------------------------------------------------------------------
def fused_aa_conv(x, halo, alpha, beta, w, b, *, dilation, tile_t, e_out,
                  out_dtype, filt, vmem_limit, residual=None):
    """AA-snake(x) followed by a dilated weight-normed Conv1d, one pallas_call.

    Returns (y, edges) where edges[:, t] = [first e_out | last e_out] samples
    of y's tile t (used by the caller to assemble the next kernel's halo).
    """
    B, C, T = x.shape
    Cout, Cin, Kc = w.shape
    TT = tile_t
    nt = T // TT
    hw = dilation * (Kc - 1) // 2
    e_in = hw + KH
    assert halo.shape == (B, nt, C, 2 * e_in)

    wk = jnp.transpose(w, (2, 0, 1)).astype(jnp.bfloat16)      # (Kc, Cout, Cin)
    b2 = b.reshape(Cout, 1).astype(jnp.float32)
    a2 = alpha.reshape(C, 1).astype(jnp.float32)
    bt2 = beta.reshape(C, 1).astype(jnp.float32)

    in_specs = [
        pl.BlockSpec((1, C, TT), lambda t, bb: (bb, 0, t)),
        pl.BlockSpec((1, 1, C, 2 * e_in), lambda t, bb: (bb, t, 0, 0)),
        pl.BlockSpec((C, 1), lambda t, bb: (0, 0)),
        pl.BlockSpec((C, 1), lambda t, bb: (0, 0)),
        pl.BlockSpec((Kc, Cout, Cin), lambda t, bb: (0, 0, 0)),
        pl.BlockSpec((Cout, 1), lambda t, bb: (0, 0)),
    ]
    args = [x, halo, a2, bt2, wk, b2]
    if residual is not None:
        in_specs.append(pl.BlockSpec((1, Cout, TT), lambda t, bb: (bb, 0, t)))
        args.append(residual.astype(jnp.float32))
        kern = _fused_kernel_res
    else:
        kern = _fused_kernel

    out_specs = [
        pl.BlockSpec((1, Cout, TT), lambda t, bb: (bb, 0, t)),
        pl.BlockSpec((1, 1, Cout, 2 * e_out), lambda t, bb: (bb, t, 0, 0)),
    ]
    out_bytes_per = 2 if out_dtype == jnp.bfloat16 else 4
    out_shape = (jax.ShapeDtypeStruct((B, Cout, T), out_dtype),
                 jax.ShapeDtypeStruct((B, nt, Cout, 2 * e_out), out_dtype))

    cost = pl.CostEstimate(
        flops=int(B * T * (2 * Kc * Cin * Cout + C * (4 * FILTER_K + 12))),
        transcendentals=int(2 * B * C * T),
        bytes_accessed=int(x.size * x.dtype.itemsize
                           + (residual.size * 4 if residual is not None else 0)
                           + B * Cout * T * out_bytes_per
                           + halo.size * halo.dtype.itemsize
                           + wk.size * 2 + Cout * 4 + 2 * C * 4),
    )

    filt_t = tuple(float(v) for v in filt)
    return pl.pallas_call(
        partial(kern, filt=filt_t, seq_len=T, tile_t=TT, hw=hw,
                dilation=dilation, kc=Kc, e_in=e_in, e_out=e_out),
        grid=(nt, B),
        in_specs=in_specs,
        out_specs=out_specs,
        out_shape=out_shape,
        compiler_params=pltpu.CompilerParams(
            dimension_semantics=("parallel", "parallel"),
            vmem_limit_bytes=vmem_limit),
        cost_estimate=cost,
    )(*args)


def _edges_from_x(x, tile_t, e):
    """Per-tile [first e | last e] samples, built from the block input only."""
    B, C, T = x.shape
    nt = T // tile_t
    xr = x.reshape(B, C, nt, tile_t)
    edges = jnp.concatenate([xr[..., :e], xr[..., tile_t - e:]], axis=-1)
    return jnp.transpose(edges, (0, 2, 1, 3))                  # (B, nt, C, 2e)


def _halo_from_edges(edges, e):
    """Per-tile [left | right] halo with edge replication at the sequence ends."""
    B, nt, C, _ = edges.shape
    first = edges[..., :e]
    last = edges[..., e:]
    rep_l = jnp.broadcast_to(first[:, :1, :, :1], (B, 1, C, e))   # x[..., 0]
    rep_r = jnp.broadcast_to(last[:, -1:, :, -1:], (B, 1, C, e))  # x[..., T-1]
    left = jnp.concatenate([rep_l, last[:, :nt - 1]], axis=1)
    right = jnp.concatenate([first[:, 1:], rep_r], axis=1)
    return jnp.concatenate([left, right], axis=-1)               # (B, nt, C, 2e)


def amp_layer(x, x_halo, p, filt, tile_t, e_next, vmem_limit):
    """x + conv2(AA2(conv1(AA1(x))))   as two fused pallas_calls."""
    Kc = p["w1"].shape[-1]
    e2 = (Kc - 1) // 2 + KH
    y1, edges1 = fused_aa_conv(
        x, x_halo, p["alpha1"], p["beta1"], p["w1"], p["b1"],
        dilation=p["dilation"], tile_t=tile_t, e_out=e2,
        out_dtype=jnp.bfloat16, filt=filt, vmem_limit=vmem_limit)
    h1 = _halo_from_edges(edges1, e2)
    y2, edges2 = fused_aa_conv(
        y1, h1, p["alpha2"], p["beta2"], p["w2"], p["b2"],
        dilation=1, tile_t=tile_t, e_out=e_next,
        out_dtype=jnp.float32, filt=filt, vmem_limit=vmem_limit, residual=x)
    return y2, edges2


def amp_block(x, params, filt, tile_t=None):
    x = x.astype(jnp.float32)
    B, C, T = x.shape
    vmem_limit, max_tile = _tpu_defaults()
    tt = tile_t if (tile_t is not None and T % tile_t == 0) else _pick_tile_t(T, max_tile)
    Kc = params[0]["w1"].shape[-1]
    dils = [p["dilation"] for p in params]

    e_first = dils[0] * (Kc - 1) // 2 + KH
    halo = _halo_from_edges(_edges_from_x(x, tt, e_first), e_first)

    y = x
    for i, p in enumerate(params):
        nd = dils[i + 1] if i + 1 < len(params) else None
        e_next = (nd * (Kc - 1) // 2 + KH) if nd is not None else KH + 1
        y, edges = amp_layer(y, halo, p, filt, tt, e_next, vmem_limit)
        if nd is not None:
            halo = _halo_from_edges(edges, e_next)
    return y


# ----------------------------------------------------------------------------
# deterministic parameter init (weight_norm folded: w = g * v / ||v||_{in,k})
# ----------------------------------------------------------------------------
def init_amp_block_params(key, channels, kernel_size, dilations):
    params = []
    for d in dilations:
        key, k1, k2, k3, k4, k5, k6, k7, k8, k9, k10 = jax.random.split(key, 11)

        def _wn_weight(kv, kg):
            v = 0.1 * jax.random.normal(kv, (channels, channels, kernel_size), jnp.float32)
            g = 0.5 + jax.random.uniform(kg, (channels, 1, 1), jnp.float32)
            norm = jnp.sqrt(jnp.sum(v * v, axis=(1, 2), keepdims=True))
            return g * v / norm

        params.append({
            "dilation": int(d),
            "w1": _wn_weight(k1, k2),
            "b1": 0.05 * jax.random.normal(k3, (channels,), jnp.float32),
            "w2": _wn_weight(k4, k5),
            "b2": 0.05 * jax.random.normal(k6, (channels,), jnp.float32),
            "alpha1": 1.0 + 0.1 * jax.random.normal(k7, (channels, 1), jnp.float32),
            "beta1": 1.0 + 0.1 * jax.random.normal(k8, (channels, 1), jnp.float32),
            "alpha2": 1.0 + 0.1 * jax.random.normal(k9, (channels, 1), jnp.float32),
            "beta2": 1.0 + 0.1 * jax.random.normal(k10, (channels, 1), jnp.float32),
        })
    return params


# ----------------------------------------------------------------------------
# pure-JAX reference (full-rate formulation, mirrors the PyTorch module)
# ----------------------------------------------------------------------------
def _ref_upsample2x(x, filt):
    B, C, T = x.shape
    K = len(filt)
    pad = K // RATIO - 1
    pad_left = pad * RATIO + (K - RATIO) // 2
    xp = jnp.pad(x, ((0, 0), (0, 0), (pad, pad)), mode="edge")
    L = xp.shape[-1]
    zs = jnp.zeros((B, C, 2 * L - 1), x.dtype).at[..., ::2].set(xp)
    zsp = jnp.pad(zs, ((0, 0), (0, 0), (K - 1, K - 1)))
    n_out = 2 * L + K - 2
    y = sum(float(filt[k]) * zsp[..., K - 1 - k:K - 1 - k + n_out] for k in range(K))
    y = RATIO * y
    return y[..., pad_left:pad_left + 2 * T]


def _ref_lowpass_down2(y, filt):
    B, C, L2 = y.shape
    K = len(filt)
    T = L2 // 2
    yp = jnp.pad(y, ((0, 0), (0, 0), (K // 2 - 1, K // 2)), mode="edge")
    return sum(float(filt[k]) * yp[..., k:k + 2 * T:2] for k in range(K))


def _ref_aa_act(x, alpha, beta, filt):
    up = _ref_upsample2x(x, filt)
    a = alpha.reshape(1, -1, 1)
    b = beta.reshape(1, -1, 1)
    s = jnp.sin(a * up)
    y = up + (1.0 / (b + 1e-9)) * s * s
    return _ref_lowpass_down2(y, filt)


def _ref_conv(x, w, b, dilation):
    B, C, T = x.shape
    Kc = w.shape[-1]
    p = dilation * (Kc - 1) // 2
    xp = jnp.pad(x, ((0, 0), (0, 0), (p, p)))
    acc = sum(jnp.einsum("oi,bit->bot", w[:, :, k],
                         xp[..., k * dilation:k * dilation + T],
                         precision=jax.lax.Precision.HIGHEST)
              for k in range(Kc))
    return acc + b.reshape(1, -1, 1)


def amp_block_ref(x, params, filt, match_kernel=False):
    """match_kernel=True emulates the kernel's bf16 MXU operands / bf16 conv1."""
    cd = jnp.bfloat16 if match_kernel else jnp.float32

    def rd(v):
        return v.astype(cd).astype(jnp.float32)

    x = x.astype(jnp.float32)
    for p in params:
        s1 = _ref_aa_act(x, p["alpha1"], p["beta1"], filt)
        y1 = _ref_conv(rd(s1), rd(p["w1"]), p["b1"], p["dilation"])
        if match_kernel:
            y1 = rd(y1)                       # conv1 output is stored as bf16
        s2 = _ref_aa_act(y1, p["alpha2"], p["beta2"], filt)
        y2 = _ref_conv(rd(s2), rd(p["w2"]), p["b2"], 1)
        x = x + y2
    return x


# ----------------------------------------------------------------------------
if __name__ == "__main__":
    B, C, T = 2, 16, 256
    kernel_size = 3
    dilations = (1, 3, 5)
    tile_t = 128   # grid (2 tiles, 2 batch): exercises halos + boundary tiles

    key = jax.random.PRNGKey(0)
    kx, kp = jax.random.split(key)
    x = jax.random.normal(kx, (B, C, T), jnp.float32)
    params = init_amp_block_params(kp, C, kernel_size, dilations)
    filt = kaiser_sinc_filter1d(0.5 / RATIO, 0.6 / RATIO, FILTER_K)

    out = jax.block_until_ready(amp_block(x, params, filt, tile_t=tile_t))

    # bf16-operand-matched reference: checks tiling / halos / fusion structure
    ref_bf16 = amp_block_ref(x, params, filt, match_kernel=True)
    # full-f32 reference: end-to-end sanity vs. the true math
    ref_f32 = amp_block_ref(x, params, filt, match_kernel=False)

    assert out.shape == (B, C, T)
    assert bool(jnp.all(jnp.isfinite(out)))
    err_b = float(jnp.max(jnp.abs(out - ref_bf16)))
    err_f = float(jnp.max(jnp.abs(out - ref_f32)))
    assert bool(jnp.allclose(out, ref_bf16, rtol=2e-2, atol=2e-2)), err_b
    assert bool(jnp.allclose(out, ref_f32, rtol=5e-2, atol=1e-1)), err_f
    print("KERNEL_OK")
</pallas_src>

<mosaic_0001>
module attributes {stable_mosaic.version = 11 : i64} {
  func.func @_fused_kernel(%arg0: i32, %arg1: i32, %arg2: memref<1x16x128xf32, #tpu.memory_space<vmem>>, %arg3: memref<1x1x16x14xf32, #tpu.memory_space<vmem>>, %arg4: memref<16x1xf32, #tpu.memory_space<vmem>>, %arg5: memref<16x1xf32, #tpu.memory_space<vmem>>, %arg6: memref<3x16x16xbf16, #tpu.memory_space<vmem>>, %arg7: memref<16x1xf32, #tpu.memory_space<vmem>>, %arg8: memref<1x16x128xbf16, #tpu.memory_space<vmem>>, %arg9: memref<1x1x16x14xbf16, #tpu.memory_space<vmem>>) attributes {dimension_semantics = [#tpu.dimension_semantics<parallel>, #tpu.dimension_semantics<parallel>], iteration_bounds = array<i64: 2, 2>, scalar_prefetch = 0 : i64, scratch_operands = 0 : i64, tpu.core_type = #tpu.core_type<tc>, window_params = [{transform_indices = @transform_0, window_bounds = array<i64: 1, 16, 128>}, {transform_indices = @transform_1, window_bounds = array<i64: 1, 1, 16, 14>}, {pipeline_mode = #tpu.pipeline_mode<synchronous>, transform_indices = @transform_2, window_bounds = array<i64: 16, 1>}, {pipeline_mode = #tpu.pipeline_mode<synchronous>, transform_indices = @transform_3, window_bounds = array<i64: 16, 1>}, {pipeline_mode = #tpu.pipeline_mode<synchronous>, transform_indices = @transform_4, window_bounds = array<i64: 3, 16, 16>}, {pipeline_mode = #tpu.pipeline_mode<synchronous>, transform_indices = @transform_5, window_bounds = array<i64: 16, 1>}, {transform_indices = @transform_6, window_bounds = array<i64: 1, 16, 128>}, {transform_indices = @transform_7, window_bounds = array<i64: 1, 1, 16, 14>}]} {
    %c128_i32 = arith.constant 128 : i32
    %0 = arith.muli %arg0, %c128_i32 : i32
    %c0 = arith.constant 0 : index
    %c0_0 = arith.constant 0 : index
    %c0_1 = arith.constant 0 : index
    %c0_2 = arith.constant 0 : index
    %1 = vector.load %arg3[%c0, %c0_0, %c0_1, %c0_2] : memref<1x1x16x14xf32, #tpu.memory_space<vmem>>, vector<1x1x16x14xf32>
    %2 = vector.shape_cast %1 : vector<1x1x16x14xf32> to vector<16x14xf32>
    %3 = vector.extract_strided_slice %2 {offsets = [0, 0], sizes = [16, 7], strides = [1, 1]} : vector<16x14xf32> to vector<16x7xf32>
    %c0_3 = arith.constant 0 : index
    %c0_4 = arith.constant 0 : index
    %c0_5 = arith.constant 0 : index
    %4 = vector.load %arg2[%c0_3, %c0_4, %c0_5] : memref<1x16x128xf32, #tpu.memory_space<vmem>>, vector<1x16x128xf32>
    %5 = vector.shape_cast %4 : vector<1x16x128xf32> to vector<16x128xf32>
    %6 = vector.extract_strided_slice %2 {offsets = [0, 7], sizes = [16, 7], strides = [1, 1]} : vector<16x14xf32> to vector<16x7xf32>
    %7 = tpu.concatenate %3, %5, %6 in 1 : vector<16x7xf32>, vector<16x128xf32>, vector<16x7xf32> -> vector<16x142xf32>
    %c0_6 = arith.constant 0 : index
    %c0_7 = arith.constant 0 : index
    %8 = vector.load %arg4[%c0_6, %c0_7] : memref<16x1xf32, #tpu.memory_space<vmem>>, vector<16x1xf32>
    %c0_8 = arith.constant 0 : index
    %c0_9 = arith.constant 0 : index
    %9 = vector.load %arg5[%c0_8, %c0_9] : memref<16x1xf32, #tpu.memory_space<vmem>>, vector<16x1xf32>
    %cst = arith.constant 9.99999971E-10 : f32
    %10 = vector.broadcast %cst : f32 to vector<16x1xf32>
    %11 = arith.addf %9, %10 : vector<16x1xf32>
    %cst_10 = arith.constant 1.000000e+00 : f32
    %12 = vector.broadcast %cst_10 : f32 to vector<16x1xf32>
    %13 = arith.divf %12, %11 : vector<16x1xf32>
    %14 = vector.extract_strided_slice %7 {offsets = [0, 5], sizes = [16, 136], strides = [1, 1]} : vector<16x142xf32> to vector<16x136xf32>
    %cst_11 = arith.constant 0.00938946381 : f32
    %15 = vector.broadcast %cst_11 : f32 to vector<16x136xf32>
    %16 = arith.mulf %15, %14 : vector<16x136xf32>
    %17 = vector.extract_strided_slice %7 {offsets = [0, 6], sizes = [16, 136], strides = [1, 1]} : vector<16x142xf32> to vector<16x136xf32>
    %cst_12 = arith.constant 0.00202896656 : f32
    %18 = vector.broadcast %cst_12 : f32 to vector<16x136xf32>
    %19 = arith.mulf %18, %17 : vector<16x136xf32>
    %20 = vector.extract_strided_slice %7 {offsets = [0, 4], sizes = [16, 136], strides = [1, 1]} : vector<16x142xf32> to vector<16x136xf32>
    %cst_13 = arith.constant -0.0576573759 : f32
    %21 = vector.broadcast %cst_13 : f32 to vector<16x136xf32>
    %22 = arith.mulf %21, %20 : vector<16x136xf32>
    %23 = arith.addf %16, %22 : vector<16x136xf32>
    %24 = vector.extract_strided_slice %7 {offsets = [0, 5], sizes = [16, 136], strides = [1, 1]} : vector<16x142xf32> to vector<16x136xf32>
    %cst_14 = arith.constant -0.0255434643 : f32
    %25 = vector.broadcast %cst_14 : f32 to vector<16x136xf32>
    %26 = arith.mulf %25, %24 : vector<16x136xf32>
    %27 = arith.addf %19, %26 : vector<16x136xf32>
    %28 = vector.extract_strided_slice %7 {offsets = [0, 3], sizes = [16, 136], strides = [1, 1]} : vector<16x142xf32> to vector<16x136xf32>
    %cst_15 = arith.constant 0.443209797 : f32
    %29 = vector.broadcast %cst_15 : f32 to vector<16x136xf32>
    %30 = arith.mulf %29, %28 : vector<16x136xf32>
    %31 = arith.addf %23, %30 : vector<16x136xf32>
    %32 = vector.extract_strided_slice %7 {offsets = [0, 4], sizes = [16, 136], strides = [1, 1]} : vector<16x142xf32> to vector<16x136xf32>
    %cst_16 = arith.constant 0.128572613 : f32
    %33 = vector.broadcast %cst_16 : f32 to vector<16x136xf32>
    %34 = arith.mulf %33, %32 : vector<16x136xf32>
    %35 = arith.addf %27, %34 : vector<16x136xf32>
    %36 = vector.extract_strided_slice %7 {offsets = [0, 2], sizes = [16, 136], strides = [1, 1]} : vector<16x142xf32> to vector<16x136xf32>
    %cst_17 = arith.constant 0.128572613 : f32
    %37 = vector.broadcast %cst_17 : f32 to vector<16x136xf32>
    %38 = arith.mulf %37, %36 : vector<16x136xf32>
    %39 = arith.addf %31, %38 : vector<16x136xf32>
    %40 = vector.extract_strided_slice %7 {offsets = [0, 3], sizes = [16, 136], strides = [1, 1]} : vector<16x142xf32> to vector<16x136xf32>
    %cst_18 = arith.constant 0.443209797 : f32
    %41 = vector.broadcast %cst_18 : f32 to vector<16x136xf32>
    %42 = arith.mulf %41, %40 : vector<16x136xf32>
    %43 = arith.addf %35, %42 : vector<16x136xf32>
    %44 = vector.extract_strided_slice %7 {offsets = [0, 1], sizes = [16, 136], strides = [1, 1]} : vector<16x142xf32> to vector<16x136xf32>
    %cst_19 = arith.constant -0.0255434643 : f32
    %45 = vector.broadcast %cst_19 : f32 to vector<16x136xf32>
    %46 = arith.mulf %45, %44 : vector<16x136xf32>
    %47 = arith.addf %39, %46 : vector<16x136xf32>
    %48 = vector.extract_strided_slice %7 {offsets = [0, 2], sizes = [16, 136], strides = [1, 1]} : vector<16x142xf32> to vector<16x136xf32>
    %cst_20 = arith.constant -0.0576573759 : f32
    %49 = vector.broadcast %cst_20 : f32 to vector<16x136xf32>
    %50 = arith.mulf %49, %48 : vector<16x136xf32>
    %51 = arith.addf %43, %50 : vector<16x136xf32>
    %52 = vector.extract_strided_slice %7 {offsets = [0, 0], sizes = [16, 136], strides = [1, 1]} : vector<16x142xf32> to vector<16x136xf32>
    %cst_21 = arith.constant 0.00202896656 : f32
    %53 = vector.broadcast %cst_21 : f32 to vector<16x136xf32>
    %54 = arith.mulf %53, %52 : vector<16x136xf32>
    %55 = arith.addf %47, %54 : vector<16x136xf32>
    %56 = vector.extract_strided_slice %7 {offsets = [0, 1], sizes = [16, 136], strides = [1, 1]} : vector<16x142xf32> to vector<16x136xf32>
    %cst_22 = arith.constant 0.00938946381 : f32
    %57 = vector.broadcast %cst_22 : f32 to vector<16x136xf32>
    %58 = arith.mulf %57, %56 : vector<16x136xf32>
    %59 = arith.addf %51, %58 : vector<16x136xf32>
    %cst_23 = arith.constant 2.000000e+00 : f32
    %60 = vector.broadcast %cst_23 : f32 to vector<16x136xf32>
    %61 = arith.mulf %60, %55 : vector<16x136xf32>
    %cst_24 = arith.constant 2.000000e+00 : f32
    %62 = vector.broadcast %cst_24 : f32 to vector<16x136xf32>
    %63 = arith.mulf %62, %59 : vector<16x136xf32>
    %64 = vector.broadcast %8 : vector<16x1xf32> to vector<16x136xf32>
    %65 = arith.mulf %64, %61 : vector<16x136xf32>
    %66 = math.sin %65 : vector<16x136xf32>
    %67 = vector.broadcast %8 : vector<16x1xf32> to vector<16x136xf32>
    %68 = arith.mulf %67, %63 : vector<16x136xf32>
    %69 = math.sin %68 : vector<16x136xf32>
    %70 = arith.mulf %66, %66 : vector<16x136xf32>
    %71 = vector.broadcast %13 : vector<16x1xf32> to vector<16x136xf32>
    %72 = arith.mulf %71, %70 : vector<16x136xf32>
    %73 = arith.addf %61, %72 : vector<16x136xf32>
    %74 = arith.mulf %69, %69 : vector<16x136xf32>
    %75 = vector.broadcast %13 : vector<16x1xf32> to vector<16x136xf32>
    %76 = arith.mulf %75, %74 : vector<16x136xf32>
    %77 = arith.addf %63, %76 : vector<16x136xf32>
    %c1_i32 = arith.constant 1 : i32
    %78 = arith.subi %0, %c1_i32 : i32
    %c3_i32 = arith.constant 3 : i32
    %79 = arith.subi %78, %c3_i32 : i32
    %80 = tpu.iota {dimensions = array<i32: 1>} : vector<1x136xi32>
    %81 = vector.broadcast %79 : i32 to vector<1x136xi32>
    %82 = arith.addi %81, %80 : vector<1x136xi32>
    %83 = vector.extract_strided_slice %73 {offsets = [0, 4], sizes = [16, 1], strides = [1, 1]} : vector<16x136xf32> to vector<16x1xf32>
    %84 = vector.extract_strided_slice %77 {offsets = [0, 131], sizes = [16, 1], strides = [1, 1]} : vector<16x136xf32> to vector<16x1xf32>
    %c0_i32 = arith.constant 0 : i32
    %85 = vector.broadcast %c0_i32 : i32 to vector<1x136xi32>
    %86 = arith.cmpi slt, %82, %85 : vector<1x136xi32>
    %c256_i32 = arith.constant 256 : i32
    %87 = vector.broadcast %c256_i32 : i32 to vector<1x136xi32>
    %88 = arith.cmpi sge, %82, %87 : vector<1x136xi32>
    %89 = vector.shape_cast %88 : vector<1x136xi1> to vector<1x136xi1>
    %90 = vector.broadcast %89 : vector<1x136xi1> to vector<16x136xi1>
    %91 = vector.shape_cast %84 : vector<16x1xf32> to vector<16x1xf32>
    %92 = vector.broadcast %91 : vector<16x1xf32> to vector<16x136xf32>
    %93 = arith.select %90, %92, %73 : vector<16x136xi1>, vector<16x136xf32>
    %94 = vector.shape_cast %86 : vector<1x136xi1> to vector<1x136xi1>
    %95 = vector.broadcast %94 : vector<1x136xi1> to vector<16x136xi1>
    %96 = vector.shape_cast %83 : vector<16x1xf32> to vector<16x1xf32>
    %97 = vector.broadcast %96 : vector<16x1xf32> to vector<16x136xf32>
    %98 = arith.select %95, %97, %93 : vector<16x136xi1>, vector<16x136xf32>
    %c0_i32_25 = arith.constant 0 : i32
    %99 = vector.broadcast %c0_i32_25 : i32 to vector<1x136xi32>
    %100 = arith.cmpi slt, %82, %99 : vector<1x136xi32>
    %c256_i32_26 = arith.constant 256 : i32
    %101 = vector.broadcast %c256_i32_26 : i32 to vector<1x136xi32>
    %102 = arith.cmpi sge, %82, %101 : vector<1x136xi32>
    %103 = vector.shape_cast %102 : vector<1x136xi1> to vector<1x136xi1>
    %104 = vector.broadcast %103 : vector<1x136xi1> to vector<16x136xi1>
    %105 = vector.shape_cast %84 : vector<16x1xf32> to vector<16x1xf32>
    %106 = vector.broadcast %105 : vector<16x1xf32> to vector<16x136xf32>
    %107 = arith.select %104, %106, %77 : vector<16x136xi1>, vector<16x136xf32>
    %108 = vector.shape_cast %100 : vector<1x136xi1> to vector<1x136xi1>
    %109 = vector.broadcast %108 : vector<1x136xi1> to vector<16x136xi1>
    %110 = vector.shape_cast %83 : vector<16x1xf32> to vector<16x1xf32>
    %111 = vector.broadcast %110 : vector<16x1xf32> to vector<16x136xf32>
    %112 = arith.select %109, %111, %107 : vector<16x136xi1>, vector<16x136xf32>
    %113 = vector.extract_strided_slice %98 {offsets = [0, 1], sizes = [16, 130], strides = [1, 1]} : vector<16x136xf32> to vector<16x130xf32>
    %cst_27 = arith.constant 0.00938946381 : f32
    %114 = vector.broadcast %cst_27 : f32 to vector<16x130xf32>
    %115 = arith.mulf %114, %113 : vector<16x130xf32>
    %116 = vector.extract_strided_slice %112 {offsets = [0, 0], sizes = [16, 130], strides = [1, 1]} : vector<16x136xf32> to vector<16x130xf32>
    %cst_28 = arith.constant 0.00202896656 : f32
    %117 = vector.broadcast %cst_28 : f32 to vector<16x130xf32>
    %118 = arith.mulf %117, %116 : vector<16x130xf32>
    %119 = arith.addf %115, %118 : vector<16x130xf32>
    %120 = vector.extract_strided_slice %98 {offsets = [0, 2], sizes = [16, 130], strides = [1, 1]} : vector<16x136xf32> to vector<16x130xf32>
    %cst_29 = arith.constant -0.0576573759 : f32
    %121 = vector.broadcast %cst_29 : f32 to vector<16x130xf32>
    %122 = arith.mulf %121, %120 : vector<16x130xf32>
    %123 = arith.addf %119, %122 : vector<16x130xf32>
    %124 = vector.extract_strided_slice %112 {offsets = [0, 1], sizes = [16, 130], strides = [1, 1]} : vector<16x136xf32> to vector<16x130xf32>
    %cst_30 = arith.constant -0.0255434643 : f32
    %125 = vector.broadcast %cst_30 : f32 to vector<16x130xf32>
    %126 = arith.mulf %125, %124 : vector<16x130xf32>
    %127 = arith.addf %123, %126 : vector<16x130xf32>
    %128 = vector.extract_strided_slice %98 {offsets = [0, 3], sizes = [16, 130], strides = [1, 1]} : vector<16x136xf32> to vector<16x130xf32>
    %cst_31 = arith.constant 0.443209797 : f32
    %129 = vector.broadcast %cst_31 : f32 to vector<16x130xf32>
    %130 = arith.mulf %129, %128 : vector<16x130xf32>
    %131 = arith.addf %127, %130 : vector<16x130xf32>
    %132 = vector.extract_strided_slice %112 {offsets = [0, 2], sizes = [16, 130], strides = [1, 1]} : vector<16x136xf32> to vector<16x130xf32>
    %cst_32 = arith.constant 0.128572613 : f32
    %133 = vector.broadcast %cst_32 : f32 to vector<16x130xf32>
    %134 = arith.mulf %133, %132 : vector<16x130xf32>
    %135 = arith.addf %131, %134 : vector<16x130xf32>
    %136 = vector.extract_strided_slice %98 {offsets = [0, 4], sizes = [16, 130], strides = [1, 1]} : vector<16x136xf32> to vector<16x130xf32>
    %cst_33 = arith.constant 0.128572613 : f32
    %137 = vector.broadcast %cst_33 : f32 to vector<16x130xf32>
    %138 = arith.mulf %137, %136 : vector<16x130xf32>
    %139 = arith.addf %135, %138 : vector<16x130xf32>
    %140 = vector.extract_strided_slice %112 {offsets = [0, 3], sizes = [16, 130], strides = [1, 1]} : vector<16x136xf32> to vector<16x130xf32>
    %cst_34 = arith.constant 0.443209797 : f32
    %141 = vector.broadcast %cst_34 : f32 to vector<16x130xf32>
    %142 = arith.mulf %141, %140 : vector<16x130xf32>
    %143 = arith.addf %139, %142 : vector<16x130xf32>
    %144 = vector.extract_strided_slice %98 {offsets = [0, 5], sizes = [16, 130], strides = [1, 1]} : vector<16x136xf32> to vector<16x130xf32>
    %cst_35 = arith.constant -0.0255434643 : f32
    %145 = vector.broadcast %cst_35 : f32 to vector<16x130xf32>
    %146 = arith.mulf %145, %144 : vector<16x130xf32>
    %147 = arith.addf %143, %146 : vector<16x130xf32>
    %148 = vector.extract_strided_slice %112 {offsets = [0, 4], sizes = [16, 130], strides = [1, 1]} : vector<16x136xf32> to vector<16x130xf32>
    %cst_36 = arith.constant -0.0576573759 : f32
    %149 = vector.broadcast %cst_36 : f32 to vector<16x130xf32>
    %150 = arith.mulf %149, %148 : vector<16x130xf32>
    %151 = arith.addf %147, %150 : vector<16x130xf32>
    %152 = vector.extract_strided_slice %98 {offsets = [0, 6], sizes = [16, 130], strides = [1, 1]} : vector<16x136xf32> to vector<16x130xf32>
    %cst_37 = arith.constant 0.00202896656 : f32
    %153 = vector.broadcast %cst_37 : f32 to vector<16x130xf32>
    %154 = arith.mulf %153, %152 : vector<16x130xf32>
    %155 = arith.addf %151, %154 : vector<16x130xf32>
    %156 = vector.extract_strided_slice %112 {offsets = [0, 5], sizes = [16, 130], strides = [1, 1]} : vector<16x136xf32> to vector<16x130xf32>
    %cst_38 = arith.constant 0.00938946381 : f32
    %157 = vector.broadcast %cst_38 : f32 to vector<16x130xf32>
    %158 = arith.mulf %157, %156 : vector<16x130xf32>
    %159 = arith.addf %155, %158 : vector<16x130xf32>
    %c1_i32_39 = arith.constant 1 : i32
    %160 = arith.subi %0, %c1_i32_39 : i32
    %161 = tpu.iota {dimensions = array<i32: 1>} : vector<1x130xi32>
    %162 = vector.broadcast %160 : i32 to vector<1x130xi32>
    %163 = arith.addi %162, %161 : vector<1x130xi32>
    %c0_i32_40 = arith.constant 0 : i32
    %164 = vector.broadcast %c0_i32_40 : i32 to vector<1x130xi32>
    %165 = arith.cmpi sge, %163, %164 : vector<1x130xi32>
    %c256_i32_41 = arith.constant 256 : i32
    %166 = vector.broadcast %c256_i32_41 : i32 to vector<1x130xi32>
    %167 = arith.cmpi slt, %163, %166 : vector<1x130xi32>
    %168 = arith.andi %165, %167 : vector<1x130xi1>
    %cst_42 = arith.constant 0.000000e+00 : f32
    %169 = vector.shape_cast %168 : vector<1x130xi1> to vector<1x130xi1>
    %170 = vector.broadcast %169 : vector<1x130xi1> to vector<16x130xi1>
    %171 = vector.broadcast %cst_42 : f32 to vector<16x130xf32>
    %172 = arith.select %170, %159, %171 : vector<16x130xi1>, vector<16x130xf32>
    %173 = arith.truncf %172 : vector<16x130xf32> to vector<16x130xbf16>
    %c0_43 = arith.constant 0 : index
    %c0_44 = arith.constant 0 : index
    %c0_45 = arith.constant 0 : index
    %174 = vector.load %arg6[%c0_43, %c0_44, %c0_45] : memref<3x16x16xbf16, #tpu.memory_space<vmem>>, vector<1x16x16xbf16>
    %175 = vector.shape_cast %174 : vector<1x16x16xbf16> to vector<16x16xbf16>
    %176 = vector.extract_strided_slice %173 {offsets = [0, 0], sizes = [16, 128], strides = [1, 1]} : vector<16x130xbf16> to vector<16x128xbf16>
    %cst_46 = arith.constant dense<0.000000e+00> : vector<16x128xf32>
    %177 = tpu.matmul %175, %176, %cst_46 {dimension_numbers = #tpu.dot_dimension_numbers<[1], [0], [0], [1], [0, 0, 1, 1], [], []>} : vector<16x16xbf16>, vector<16x128xbf16>, vector<16x128xf32> -> vector<16x128xf32>
    %c1 = arith.constant 1 : index
    %c0_47 = arith.constant 0 : index
    %c0_48 = arith.constant 0 : index
    %178 = vector.load %arg6[%c1, %c0_47, %c0_48] : memref<3x16x16xbf16, #tpu.memory_space<vmem>>, vector<1x16x16xbf16>
    %179 = vector.shape_cast %178 : vector<1x16x16xbf16> to vector<16x16xbf16>
    %180 = vector.extract_strided_slice %173 {offsets = [0, 1], sizes = [16, 128], strides = [1, 1]} : vector<16x130xbf16> to vector<16x128xbf16>
    %cst_49 = arith.constant dense<0.000000e+00> : vector<16x128xf32>
    %181 = tpu.matmul %179, %180, %cst_49 {dimension_numbers = #tpu.dot_dimension_numbers<[1], [0], [0], [1], [0, 0, 1, 1], [], []>} : vector<16x16xbf16>, vector<16x128xbf16>, vector<16x128xf32> -> vector<16x128xf32>
    %182 = arith.addf %177, %181 : vector<16x128xf32>
    %c2 = arith.constant 2 : index
    %c0_50 = arith.constant 0 : index
    %c0_51 = arith.constant 0 : index
    %183 = vector.load %arg6[%c2, %c0_50, %c0_51] : memref<3x16x16xbf16, #tpu.memory_space<vmem>>, vector<1x16x16xbf16>
    %184 = vector.shape_cast %183 : vector<1x16x16xbf16> to vector<16x16xbf16>
    %185 = vector.extract_strided_slice %173 {offsets = [0, 2], sizes = [16, 128], strides = [1, 1]} : vector<16x130xbf16> to vector<16x128xbf16>
    %cst_52 = arith.constant dense<0.000000e+00> : vector<16x128xf32>
    %186 = tpu.matmul %184, %185, %cst_52 {dimension_numbers = #tpu.dot_dimension_numbers<[1], [0], [0], [1], [0, 0, 1, 1], [], []>} : vector<16x16xbf16>, vector<16x128xbf16>, vector<16x128xf32> -> vector<16x128xf32>
    %187 = arith.addf %182, %186 : vector<16x128xf32>
    %c0_53 = arith.constant 0 : index
    %c0_54 = arith.constant 0 : index
    %188 = vector.load %arg7[%c0_53, %c0_54] : memref<16x1xf32, #tpu.memory_space<vmem>>, vector<16x1xf32>
    %189 = vector.broadcast %188 : vector<16x1xf32> to vector<16x128xf32>
    %190 = arith.addf %187, %189 : vector<16x128xf32>
    %191 = arith.truncf %190 : vector<16x128xf32> to vector<16x128xbf16>
    %c0_55 = arith.constant 0 : index
    %c0_56 = arith.constant 0 : index
    %c0_57 = arith.constant 0 : index
    %192 = vector.load %arg8[%c0_55, %c0_56, %c0_57] : memref<1x16x128xbf16, #tpu.memory_space<vmem>>, vector<1x16x128xbf16>
    %193 = vector.shape_cast %192 : vector<1x16x128xbf16> to vector<16x128xbf16>
    %194 = vector.shape_cast %191 : vector<16x128xbf16> to vector<1x16x128xbf16>
    tpu.vector_store %arg8[%c0_55, %c0_56, %c0_57], %194 {strides = array<i32>} : memref<1x16x128xbf16, #tpu.memory_space<vmem>>, vector<1x16x128xbf16>,
    %195 = vector.extract_strided_slice %191 {offsets = [0, 0], sizes = [16, 7], strides = [1, 1]} : vector<16x128xbf16> to vector<16x7xbf16>
    %196 = vector.extract_strided_slice %191 {offsets = [0, 121], sizes = [16, 7], strides = [1, 1]} : vector<16x128xbf16> to vector<16x7xbf16>
    %197 = tpu.concatenate %195, %196 in 1 : vector<16x7xbf16>, vector<16x7xbf16> -> vector<16x14xbf16>
    %c0_58 = arith.constant 0 : index
    %c0_59 = arith.constant 0 : index
    %c0_60 = arith.constant 0 : index
    %c0_61 = arith.constant 0 : index
    %198 = vector.load %arg9[%c0_58, %c0_59, %c0_60, %c0_61] : memref<1x1x16x14xbf16, #tpu.memory_space<vmem>>, vector<1x1x16x14xbf16>
    %199 = vector.shape_cast %198 : vector<1x1x16x14xbf16> to vector<16x14xbf16>
    %200 = vector.shape_cast %197 : vector<16x14xbf16> to vector<1x1x16x14xbf16>
    tpu.vector_store %arg9[%c0_58, %c0_59, %c0_60, %c0_61], %200 {strides = array<i32>} : memref<1x1x16x14xbf16, #tpu.memory_space<vmem>>, vector<1x1x16x14xbf16>,
    return
  }
  func.func @transform_0(%arg0: i32, %arg1: i32) -> (i32, i32, i32) {
    %c0_i32 = arith.constant 0 : i32
    %c0_i32_0 = arith.constant 0 : i32
    return %arg1, %c0_i32, %arg0 : i32, i32, i32
  }
  func.func @transform_1(%arg0: i32, %arg1: i32) -> (i32, i32, i32, i32) {
    %c0_i32 = arith.constant 0 : i32
    %c0_i32_0 = arith.constant 0 : i32
    %c0_i32_1 = arith.constant 0 : i32
    return %arg1, %arg0, %c0_i32, %c0_i32_0 : i32, i32, i32, i32
  }
  func.func @transform_2(%arg0: i32, %arg1: i32) -> (i32, i32) {
    %c0_i32 = arith.constant 0 : i32
    %c0_i32_0 = arith.constant 0 : i32
    %c0_i32_1 = arith.constant 0 : i32
    return %c0_i32, %c0_i32_0 : i32, i32
  }
  func.func @transform_3(%arg0: i32, %arg1: i32) -> (i32, i32) {
    %c0_i32 = arith.constant 0 : i32
    %c0_i32_0 = arith.constant 0 : i32
    %c0_i32_1 = arith.constant 0 : i32
    return %c0_i32, %c0_i32_0 : i32, i32
  }
  func.func @transform_4(%arg0: i32, %arg1: i32) -> (i32, i32, i32) {
    %c0_i32 = arith.constant 0 : i32
    %c0_i32_0 = arith.constant 0 : i32
    %c0_i32_1 = arith.constant 0 : i32
    %c0_i32_2 = arith.constant 0 : i32
    return %c0_i32, %c0_i32_0, %c0_i32_1 : i32, i32, i32
  }
  func.func @transform_5(%arg0: i32, %arg1: i32) -> (i32, i32) {
    %c0_i32 = arith.constant 0 : i32
    %c0_i32_0 = arith.constant 0 : i32
    %c0_i32_1 = arith.constant 0 : i32
    return %c0_i32, %c0_i32_0 : i32, i32
  }
  func.func @transform_6(%arg0: i32, %arg1: i32) -> (i32, i32, i32) {
    %c0_i32 = arith.constant 0 : i32
    %c0_i32_0 = arith.constant 0 : i32
    return %arg1, %c0_i32, %arg0 : i32, i32, i32
  }
  func.func @transform_7(%arg0: i32, %arg1: i32) -> (i32, i32, i32, i32) {
    %c0_i32 = arith.constant 0 : i32
    %c0_i32_0 = arith.constant 0 : i32
    %c0_i32_1 = arith.constant 0 : i32
    return %arg1, %arg0, %c0_i32, %c0_i32_0 : i32, i32, i32, i32
  }
}

</mosaic_0001>

<llo_original>
// kernel: tpu_custom_call.1
$region0: #{tpu_custom_call.1}
  #allocation0 [shape = 'u32[]', space=smem, size = 0x4, offset = 0x4, fixed_abs, tag = 'smem constant byte address 0x4 - core index']
  #allocation1 [shape = 'u32[144,128]{1,0:T(1,128)}', space=vmem, size = 0x12000, scoped, tag = 'internal scratch']
  %s0 = inlined_call_operand.vmem [shape: f32[2,16,256], index: 0, kind: input, shape index: {}]
  %s1 = inlined_call_operand.vmem [shape: f32[2,2,16,14], index: 1, kind: input, shape index: {}]
  %s2 = inlined_call_operand.vmem [shape: f32[16,1], index: 2, kind: input, shape index: {}]
  %s3 = inlined_call_operand.vmem [shape: f32[16,1], index: 3, kind: input, shape index: {}]
  %s4 = inlined_call_operand.vmem [shape: bf16[3,16,16], index: 4, kind: input, shape index: {}]
  %s5 = inlined_call_operand.vmem [shape: f32[16,1], index: 5, kind: input, shape index: {}]
  %s6 = inlined_call_operand.hbm [shape: bf16[2,16,256], index: 6, kind: output, shape index: {0}]
  %s7 = inlined_call_operand.vmem [shape: bf16[2,2,16,14], index: 7, kind: output, shape index: {1}]
  %8 = xla_tuple %s6, %s7
  %s9 = sld [smem:[#allocation0]]
  $region103: #{tpu_custom_call.1} parent=0
    _
  %s11 = ssub.s32 1, %s9
  %s12 = scalar_select 0, %s11, %s9
  $region1: #{tpu_custom_call.1} parent=0
    #allocation2 [shape = 'u8[16384]{0}', space=vmem, size = 0x4000, scoped, tag = 'input window, operand 0']
    #allocation3 [shape = 'u8[8192]{0}', space=vmem, size = 0x2000, scoped, tag = 'output window, operand 0']
    #allocation4 [shape = 's32[2]{0}', space=sflag, size = 0x8, scoped, tag = 'scoped memory for tpu_custom_call.1']
    %13 = vsyncpa [#allocation4], 0
    %s14 = scalar_lea.sflag [#allocation4], 1
    %15 = vsyncpa %s14, 0
    loop: start=0, step=1, limit=6
    $region2: #{tpu_custom_call.1} parent=1 // loop_pre_header
      _
    $region3: #{tpu_custom_call.1} parent=1 // loop_header
      %s17 = sphi 0, %s21
      %p18 = scmp.ge.s32.totalorder %s17, 6
      %s24 = sphi 0, %s36
      %s25 = sphi 0, %s32
      %s26 = sphi 0, %s24
      %s27 = sphi 0, %s25
      %s28 = sphi 0, %s26
      %s29 = sphi 0, %s27
      %s41 = sphi 0, %s43
      %s44 = sphi 0, %s41
      %s45 = sphi 0, %s44
      %s61 = sphi 0, %s45
      %s69 = sphi 0, %s71
      %s72 = sphi 0, %s69
      %s73 = sphi 0, %s72
      %s89 = sphi 0, %s73
      %s93 = sphi 0, %s93
      %s95 = sphi 0, %s93
      %s96 = sphi 0, %s95
      %s110 = sphi 0, %s96
      %s114 = sphi 0, %s114
      %s116 = sphi 0, %s114
      %s117 = sphi 0, %s116
      %s131 = sphi 0, %s117
      %s135 = sphi 0, %s135
      %s137 = sphi 0, %s135
      %s138 = sphi 0, %s137
      %s152 = sphi 0, %s138
      %s156 = sphi 0, %s156
      %s158 = sphi 0, %s156
      %s159 = sphi 0, %s158
      %s173 = sphi 0, %s159
      %s181 = sphi 0, %s183
      %s184 = sphi 0, %s181
      %s185 = sphi 0, %s184
      %s201 = sphi 0, %s185
      %s209 = sphi 0, %s211
      %s212 = sphi 0, %s209
      %s213 = sphi 0, %s212
      %s229 = sphi 0, %s213
    $region4: #{tpu_custom_call.1} parent=1 // loop_header_branch
      %20 = sbr.rel (%p18) target = $region8
    $region5: #{tpu_custom_call.1} parent=1 // loop_body
      %s22 = ssub.s32 %s17, 1
      %s23 = ssub.s32 %s17, 2
      %s30 = sadd.s32 1, %s25
      %p31 = scmp.ge.s32.totalorder %s30, 2
      %s32 = scalar_select %p31, 0, %s30
      %s33 = sadd.s32 1, %s24
      %s34 = scalar_select %p31, %s33, %s24
      %p35 = scmp.ge.s32.totalorder %s34, 2
      %s36 = scalar_select %p35, 0, %s34
      %s37 = ssub.s32 %s25, %s32
      %s38 = ssub.s32 %s24, %s36
      %s39 = sor.u32 %s37, %s38
      %p40 = scmp.eq.s32.totalorder %s39, 0
      %s42 = sadd.s32 %s41, 1
      %s43 = scalar_select %p40, %s41, %s42
      %p46 = pneg %p40
      %p47 = scmp.eq.s32.totalorder %s17, 3
      %p48 = por %p46, %p47
      %p49 = scmp.ne.s32.totalorder %s41, %s44
      %p50 = scmp.eq.s32.totalorder %s17, 0
      %p51 = por %p49, %p50
      %p52 = scmp.ne.s32.totalorder %s41, %s44
      %p53 = scmp.eq.s32.totalorder %s22, 3
      %p54 = por %p52, %p53
      %p55 = scmp.ne.s32.totalorder %s44, %s45
      %p56 = scmp.eq.s32.totalorder %s22, 0
      %p57 = por %p55, %p56
      %p58 = scmp.ne.s32.totalorder %s44, %s45
      %p59 = scmp.eq.s32.totalorder %s23, 3
      %p60 = por %p58, %p59
      %p62 = scmp.ne.s32.totalorder %s45, %s61
      %p63 = scmp.eq.s32.totalorder %s23, 0
      %p64 = por %p62, %p63
      %s65 = ssub.s32 %s25, %s32
      %s66 = ssub.s32 %s24, %s36
      %s67 = sor.u32 %s65, %s66
      %p68 = scmp.eq.s32.totalorder %s67, 0
      %s70 = sadd.s32 %s69, 1
      %s71 = scalar_select %p68, %s69, %s70
      %p74 = pneg %p68
      %p75 = scmp.eq.s32.totalorder %s17, 3
      %p76 = por %p74, %p75
      %p77 = scmp.ne.s32.totalorder %s69, %s72
      %p78 = scmp.eq.s32.totalorder %s17, 0
      %p79 = por %p77, %p78
      %p80 = scmp.ne.s32.totalorder %s69, %s72
      %p81 = scmp.eq.s32.totalorder %s22, 3
      %p82 = por %p80, %p81
      %p83 = scmp.ne.s32.totalorder %s72, %s73
      %p84 = scmp.eq.s32.totalorder %s22, 0
      %p85 = por %p83, %p84
      %p86 = scmp.ne.s32.totalorder %s72, %s73
      %p87 = scmp.eq.s32.totalorder %s23, 3
      %p88 = por %p86, %p87
      %p90 = scmp.ne.s32.totalorder %s73, %s89
      %p91 = scmp.eq.s32.totalorder %s23, 0
      %p92 = por %p90, %p91
      %s94 = sadd.s32 %s93, 1
      %p97 = scmp.eq.s32.totalorder %s17, 3
      %p98 = scmp.ne.s32.totalorder %s93, %s95
      %p99 = scmp.eq.s32.totalorder %s17, 0
      %p100 = por %p98, %p99
      %p101 = scmp.ne.s32.totalorder %s93, %s95
      %p102 = scmp.eq.s32.totalorder %s22, 3
      %p103 = por %p101, %p102
      %p104 = scmp.ne.s32.totalorder %s95, %s96
      %p105 = scmp.eq.s32.totalorder %s22, 0
      %p106 = por %p104, %p105
      %p107 = scmp.ne.s32.totalorder %s95, %s96
      %p108 = scmp.eq.s32.totalorder %s23, 3
      %p109 = por %p107, %p108
      %p111 = scmp.ne.s32.totalorder %s96, %s110
      %p112 = scmp.eq.s32.totalorder %s23, 0
      %p113 = por %p111, %p112
      %s115 = sadd.s32 %s114, 1
      %p118 = scmp.eq.s32.totalorder %s17, 3
      %p119 = scmp.ne.s32.totalorder %s114, %s116
      %p120 = scmp.eq.s32.totalorder %s17, 0
      %p121 = por %p119, %p120
      %p122 = scmp.ne.s32.totalorder %s114, %s116
      %p123 = scmp.eq.s32.totalorder %s22, 3
      %p124 = por %p122, %p123
      %p125 = scmp.ne.s32.totalorder %s116, %s117
      %p126 = scmp.eq.s32.totalorder %s22, 0
      %p127 = por %p125, %p126
      %p128 = scmp.ne.s32.totalorder %s116, %s117
      %p129 = scmp.eq.s32.totalorder %s23, 3
      %p130 = por %p128, %p129
      %p132 = scmp.ne.s32.totalorder %s117, %s131
      %p133 = scmp.eq.s32.totalorder %s23, 0
      %p134 = por %p132, %p133
      %s136 = sadd.s32 %s135, 1
      %p139 = scmp.eq.s32.totalorder %s17, 3
      %p140 = scmp.ne.s32.totalorder %s135, %s137
      %p141 = scmp.eq.s32.totalorder %s17, 0
      %p142 = por %p140, %p141
      %p143 = scmp.ne.s32.totalorder %s135, %s137
      %p144 = scmp.eq.s32.totalorder %s22, 3
      %p145 = por %p143, %p144
      %p146 = scmp.ne.s32.totalorder %s137, %s138
      %p147 = scmp.eq.s32.totalorder %s22, 0
      %p148 = por %p146, %p147
      %p149 = scmp.ne.s32.totalorder %s137, %s138
      %p150 = scmp.eq.s32.totalorder %s23, 3
      %p151 = por %p149, %p150
      %p153 = scmp.ne.s32.totalorder %s138, %s152
      %p154 = scmp.eq.s32.totalorder %s23, 0
      %p155 = por %p153, %p154
      %s157 = sadd.s32 %s156, 1
      %p160 = scmp.eq.s32.totalorder %s17, 3
      %p161 = scmp.ne.s32.totalorder %s156, %s158
      %p162 = scmp.eq.s32.totalorder %s17, 0
      %p163 = por %p161, %p162
      %p164 = scmp.ne.s32.totalorder %s156, %s158
      %p165 = scmp.eq.s32.totalorder %s22, 3
      %p166 = por %p164, %p165
      %p167 = scmp.ne.s32.totalorder %s158, %s159
      %p168 = scmp.eq.s32.totalorder %s22, 0
      %p169 = por %p167, %p168
      %p170 = scmp.ne.s32.totalorder %s158, %s159
      %p171 = scmp.eq.s32.totalorder %s23, 3
      %p172 = por %p170, %p171
      %p174 = scmp.ne.s32.totalorder %s159, %s173
      %p175 = scmp.eq.s32.totalorder %s23, 0
      %p176 = por %p174, %p175
      %s177 = ssub.s32 %s25, %s32
      %s178 = ssub.s32 %s24, %s36
      %s179 = sor.u32 %s177, %s178
      %p180 = scmp.eq.s32.totalorder %s179, 0
      %s182 = sadd.s32 %s181, 1
      %s183 = scalar_select %p180, %s181, %s182
      %p186 = pneg %p180
      %p187 = scmp.eq.s32.totalorder %s17, 3
      %p188 = por %p186, %p187
      %p189 = scmp.ne.s32.totalorder %s181, %s184
      %p190 = scmp.eq.s32.totalorder %s17, 0
      %p191 = por %p189, %p190
      %p192 = scmp.ne.s32.totalorder %s181, %s184
      %p193 = scmp.eq.s32.totalorder %s22, 3
      %p194 = por %p192, %p193
      %p195 = scmp.ne.s32.totalorder %s184, %s185
      %p196 = scmp.eq.s32.totalorder %s22, 0
      %p197 = por %p195, %p196
      %p198 = scmp.ne.s32.totalorder %s184, %s185
      %p199 = scmp.eq.s32.totalorder %s23, 3
      %p200 = por %p198, %p199
      %p202 = scmp.ne.s32.totalorder %s185, %s201
      %p203 = scmp.eq.s32.totalorder %s23, 0
      %p204 = por %p202, %p203
      %s205 = ssub.s32 %s25, %s32
      %s206 = ssub.s32 %s24, %s36
      %s207 = sor.u32 %s205, %s206
      %p208 = scmp.eq.s32.totalorder %s207, 0
      %s210 = sadd.s32 %s209, 1
      %s211 = scalar_select %p208, %s209, %s210
      %p214 = pneg %p208
      %p215 = scmp.eq.s32.totalorder %s17, 3
      %p216 = por %p214, %p215
      %p217 = scmp.ne.s32.totalorder %s209, %s212
      %p218 = scmp.eq.s32.totalorder %s17, 0
      %p219 = por %p217, %p218
      %p220 = scmp.ne.s32.totalorder %s209, %s212
      %p221 = scmp.eq.s32.totalorder %s22, 3
      %p222 = por %p220, %p221
      %p223 = scmp.ne.s32.totalorder %s212, %s213
      %p224 = scmp.eq.s32.totalorder %s22, 0
      %p225 = por %p223, %p224
      %p226 = scmp.ne.s32.totalorder %s212, %s213
      %p227 = scmp.eq.s32.totalorder %s23, 3
      %p228 = por %p226, %p227
      %p230 = scmp.ne.s32.totalorder %s213, %s229
      %p231 = scmp.eq.s32.totalorder %s23, 0
      %p232 = por %p230, %p231
      %p233 = scmp.le.s32.totalorder 1, %s17
      %p234 = scmp.lt.s32.totalorder %s17, 5
      %p235 = pnand %p233, %p234
      %p236 = pneg %p235
      // Predicated region
      $region9: #{tpu_custom_call.1} parent=5 // pred_check
        _
      $region10: #{tpu_custom_call.1} parent=5 // pred_check_branch
        %238 = sbr.rel (%p235) target = $region12
      $region11: #{tpu_custom_call.1} parent=5 // pred_region
        %s239 = ssub.s32 %s17, 1
        // Predicated region
        $region13: #{tpu_custom_call.1} parent=11 // pred_check
          %p240 = pneg %p106
        $region14: #{tpu_custom_call.1} parent=11 // pred_check_branch
          %242 = sbr.rel (%p240) target = $region16
        $region15: #{tpu_custom_call.1} parent=11 // pred_region
          _
        $region16: #{tpu_custom_call.1} parent=11 // pred_fallthru
          _
        // Predicated region
        $region17: #{tpu_custom_call.1} parent=11 // pred_check
          %p243 = pneg %p127
        $region18: #{tpu_custom_call.1} parent=11 // pred_check_branch
          %245 = sbr.rel (%p243) target = $region20
        $region19: #{tpu_custom_call.1} parent=11 // pred_region
          _
        $region20: #{tpu_custom_call.1} parent=11 // pred_fallthru
          _
        // Predicated region
        $region21: #{tpu_custom_call.1} parent=11 // pred_check
          %p246 = pneg %p148
        $region22: #{tpu_custom_call.1} parent=11 // pred_check_branch
          %248 = sbr.rel (%p246) target = $region24
        $region23: #{tpu_custom_call.1} parent=11 // pred_region
          _
        $region24: #{tpu_custom_call.1} parent=11 // pred_fallthru
          _
        // Predicated region
        $region25: #{tpu_custom_call.1} parent=11 // pred_check
          %p249 = pneg %p169
        $region26: #{tpu_custom_call.1} parent=11 // pred_check_branch
          %251 = sbr.rel (%p249) target = $region28
        $region27: #{tpu_custom_call.1} parent=11 // pred_region
          _
        $region28: #{tpu_custom_call.1} parent=11 // pred_fallthru
          _
      $region12: #{tpu_custom_call.1} parent=5 // pred_fallthru
        _
      %p252 = scmp.lt.s32.totalorder %s17, 4
      // Predicated region
      $region29: #{tpu_custom_call.1} parent=5 // pred_check
        %p253 = pneg %p252
      $region30: #{tpu_custom_call.1} parent=5 // pred_check_branch
        %255 = sbr.rel (%p253) target = $region32
      $region31: #{tpu_custom_call.1} parent=5 // pred_region
        // Predicated region
        $region33: #{tpu_custom_call.1} parent=31 // pred_check
          %p256 = pneg %p51
        $region34: #{tpu_custom_call.1} parent=31 // pred_check_branch
          %258 = sbr.rel (%p256) target = $region36
        $region35: #{tpu_custom_call.1} parent=31 // pred_region
          %s259 = sand.u32 %s41, 1
          %s260 = sand.u32 %s41, 1
          %s261 = smul.addr %s260, 16
          %s262 = scalar_lea.vmem [#allocation2], %s261
          %s263 = smul.addr %s25, 4
          %s264 = sadd.s32 %s24, %s263
          %s265 = smul.addr %s264, 8
          %s266 = scalar_lea.vmem %s0, %s265
          // Predicated region
          $region37: #{tpu_custom_call.1} parent=35 // pred_check
            _
          $region38: #{tpu_custom_call.1} parent=35 // pred_check_branch
            %268 = sbr.rel (0) target = $region40
          $region39: #{tpu_custom_call.1} parent=35 // pred_region
            // Predicated region
            $region41: #{tpu_custom_call.1} parent=39 // pred_check
              _
            $region42: #{tpu_custom_call.1} parent=39 // pred_check_branch
              %270 = sbr.rel (0) target = $region44
            $region43: #{tpu_custom_call.1} parent=39 // pred_region
              // Predicated region
              $region56: #{tpu_custom_call.1} parent=43 // pred_check
                _
              $region57: #{tpu_custom_call.1} parent=43 // pred_check_branch
                %287 = sbr.rel (0) target = $region59
              $region58: #{tpu_custom_call.1} parent=43 // pred_region
                loop: start=0, step=1, limit=1
                $region60: #{tpu_custom_call.1} parent=58 // loop_pre_header
                  _
                $region61: #{tpu_custom_call.1} parent=58 // loop_header
                  %s289 = sphi 0, %s293
                  %p290 = scmp.ge.s32.totalorder %s289, 1
                  %s294 = sphi %s266, %s266
                  %s295 = sphi %s262, %s262
                $region62: #{tpu_custom_call.1} parent=58 // loop_header_branch
                  %292 = sbr.rel (%p290) target = $region66
                $region63: #{tpu_custom_call.1} parent=58 // loop_body
                  %v296 = vld [vmem:[%s294] sm:$0xff]
                  %297 = vst [vmem:[%s295] sm:$0xff] %v296
                  %v298 = vld [vmem:[%s294 + $0x10] sm:$0xff]
                  %299 = vst [vmem:[%s295 + $0x8] sm:$0xff] %v298
                $region64: #{tpu_custom_call.1} parent=58 // loop_footer
                  %s293 = sadd.s32 1, %s289
                $region65: #{tpu_custom_call.1} parent=58 // loop_footer_branch
                  %288 = sbr.rel target = $region61
                $region66: #{tpu_custom_call.1} parent=58 // loop_exit
                  _
              $region59: #{tpu_custom_call.1} parent=43 // pred_fallthru
                _
              // Predicated region
              $region67: #{tpu_custom_call.1} parent=43 // pred_check
                _
              $region68: #{tpu_custom_call.1} parent=43 // pred_check_branch
                %301 = sbr.rel target = $region70
              $region69: #{tpu_custom_call.1} parent=43 // pred_region
                _
              $region70: #{tpu_custom_call.1} parent=43 // pred_fallthru
                _
            $region44: #{tpu_custom_call.1} parent=39 // pred_fallthru
              _
            // Predicated region
            $region45: #{tpu_custom_call.1} parent=39 // pred_check
              _
            $region46: #{tpu_custom_call.1} parent=39 // pred_check_branch
              %272 = sbr.rel target = $region48
            $region47: #{tpu_custom_call.1} parent=39 // pred_region
              loop: start=0, step=1, limit=1
              $region49: #{tpu_custom_call.1} parent=47 // loop_pre_header
                _
              $region50: #{tpu_custom_call.1} parent=47 // loop_header
                %s275 = sphi 0, %s279
                %p276 = scmp.ge.s32.totalorder %s275, 1
                %s280 = sphi %s266, %s266
                %s281 = sphi %s262, %s262
              $region51: #{tpu_custom_call.1} parent=47 // loop_header_branch
                %278 = sbr.rel (%p276) target = $region55
              $region52: #{tpu_custom_call.1} parent=47 // loop_body
                %v282 = vld [vmem:[%s280] sm:$0xff]
                %283 = vst [vmem:[%s281] sm:$0xff] %v282
                %v284 = vld [vmem:[%s280 + $0x10] sm:$0xff]
                %285 = vst [vmem:[%s281 + $0x8] sm:$0xff] %v284
              $region53: #{tpu_custom_call.1} parent=47 // loop_footer
                %s279 = sadd.s32 1, %s275
              $region54: #{tpu_custom_call.1} parent=47 // loop_footer_branch
                %274 = sbr.rel target = $region50
              $region55: #{tpu_custom_call.1} parent=47 // loop_exit
                _
            $region48: #{tpu_custom_call.1} parent=39 // pred_fallthru
              _
          $region40: #{tpu_custom_call.1} parent=35 // pred_fallthru
            _
          %302 = vnop
        $region36: #{tpu_custom_call.1} parent=31 // pred_fallthru
          _
        // Predicated region
        $region71: #{tpu_custom_call.1} parent=31 // pred_check
          %p303 = pneg %p79
        $region72: #{tpu_custom_call.1} parent=31 // pred_check_branch
          %305 = sbr.rel (%p303) target = $region74
        $region73: #{tpu_custom_call.1} parent=31 // pred_region
          %p306 = scmp.lt.s32.totalorder %s25, 1
          %s307 = scalar_select %p306, %s25, 1
          %p308 = scmp.lt.s32.totalorder %s24, 1
          %s309 = scalar_select %p308, %s24, 1
          %s310 = smul.addr %s309, 2
          %s311 = smul.addr %s307, 4
          %s312 = sadd.s32 %s310, %s311
          %s313 = smul.addr %s312, 8
          %s314 = scalar_lea.vmem %s1, %s313
        $region74: #{tpu_custom_call.1} parent=31 // pred_fallthru
          _
      $region32: #{tpu_custom_call.1} parent=5 // pred_fallthru
        _
      %p315 = scmp.le.s32.totalorder 1, %s17
      %p316 = scmp.lt.s32.totalorder %s17, 5
      %p317 = pnand %p315, %p316
      %p318 = pneg %p317
      // Predicated region
      $region75: #{tpu_custom_call.1} parent=5 // pred_check
        _
      $region76: #{tpu_custom_call.1} parent=5 // pred_check_branch
        %320 = sbr.rel (%p317) target = $region78
      $region77: #{tpu_custom_call.1} parent=5 // pred_region
        %s321 = ssub.s32 %s17, 1
        %s322 = sand.u32 %s44, 1
        %s323 = sand.u32 %s44, 1
        %s324 = smul.addr %s323, 16
        %s325 = scalar_lea.vmem [#allocation2], %s324
        // Predicated region
        $region79: #{tpu_custom_call.1} parent=77 // pred_check
          %p326 = pneg %p57
        $region80: #{tpu_custom_call.1} parent=77 // pred_check_branch
          %328 = sbr.rel (%p326) target = $region82
        $region81: #{tpu_custom_call.1} parent=77 // pred_region
          _
        $region82: #{tpu_custom_call.1} parent=77 // pred_fallthru
          _
        %s329 = sand.u32 %s44, 1
        %s330 = sand.u32 %s44, 1
        %s331 = smul.addr %s330, 16
        %s332 = scalar_lea.vmem [#allocation2], %s331
        %p333 = pneg %p57
        %p334 = pneg %p54
        %p335 = scmp.lt.s32.totalorder %s27, 1
        %s336 = scalar_select %p335, %s27, 1
        %p337 = scmp.lt.s32.totalorder %s26, 1
        %s338 = scalar_select %p337, %s26, 1
        %s339 = smul.addr %s338, 2
        %s340 = smul.addr %s336, 4
        %s341 = sadd.s32 %s339, %s340
        %s342 = smul.addr %s341, 8
        %s343 = scalar_lea.vmem %s1, %s342
        %p344 = pneg %p85
        %p345 = pneg %p82
        %p346 = pneg %p106
        %p347 = pneg %p103
        %p348 = pneg %p127
        %p349 = pneg %p124
        %p350 = pneg %p148
        %p351 = pneg %p145
        %p352 = pneg %p169
        %p353 = pneg %p166
        %p354 = pneg %p197
        %p355 = pneg %p194
        %s356 = sand.u32 %s184, 1
        %s357 = scalar_lea.sflag [#allocation4], %s356
        %s358 = sand.u32 %s184, 1
        %s359 = smul.addr %s358, 8
        %s360 = scalar_lea.vmem [#allocation3], %s359
        %p361 = pneg %p225
        %p362 = pneg %p222
        %p363 = scmp.lt.s32.totalorder %s27, 1
        %s364 = scalar_select %p363, %s27, 1
        %p365 = scmp.lt.s32.totalorder %s26, 1
        %s366 = scalar_select %p365, %s26, 1
        %s367 = smul.addr %s366, 2
        %s368 = smul.addr %s364, 4
        %s369 = sadd.s32 %s367, %s368
        %s370 = smul.addr %s369, 4
        %s371 = scalar_lea.vmem %s7, %s370
        %p372 = scmp.lt.s32.totalorder %s27, 1
        %s373 = scalar_select %p372, %s27, 1
        %p374 = scmp.lt.s32.totalorder %s26, 1
        %s375 = scalar_select %p374, %s26, 1
        %s376 = smul.addr %s375, 2
        %s377 = smul.addr %s373, 4
        %s378 = sadd.s32 %s376, %s377
        %s379 = smul.addr %s378, 8
        %s380 = scalar_lea.vmem %s1, %s379
        %p381 = scmp.lt.s32.totalorder %s27, 1
        %s382 = scalar_select %p381, %s27, 1
        %p383 = scmp.lt.s32.totalorder %s26, 1
        %s384 = scalar_select %p383, %s26, 1
        %s385 = smul.addr %s384, 2
        %s386 = smul.addr %s382, 4
        %s387 = sadd.s32 %s385, %s386
        %s388 = smul.addr %s387, 4
        %s389 = scalar_lea.vmem %s7, %s388
        %s391 = smul.u32 %s26, 128
        %v392 = vld [vmem:[%s380] sm:$0xff]
        %v393 = vld [vmem:[%s380 + $0x8] sm:$0xff]
        %v394 = vld [vmem:[%s325] sm:$0xff]
        %v395 = vld [vmem:[%s325 + $0x8] sm:$0xff]
        %398 = vrot.lane.b32.xlu0 %v394, 7
        %v399 = vpop.permute.xlu0 %398
        %400 = vrot.lane.b32.xlu0 %v395, 7
        %v401 = vpop.permute.xlu0 %400
        %vm404 = vcmask 56320
        %v405 = vsel %vm404, %v392, %v399
        %v406 = vsel %vm404, %v393, %v401
        %v407 = vsel %vm404, %v399, %v392
        %v408 = vsel %vm404, %v401, %v393
        %v409 = vld [vmem:[%s2] sm:$0xff]
        %v410 = vld [vmem:[%s2 + $0x8] sm:$0xff]
        %v411 = vld [vmem:[%s3] sm:$0xff]
        %v412 = vld [vmem:[%s3 + $0x8] sm:$0xff]
        %v413 = vadd.f32 %v411, 1e-09
        %v414 = vadd.f32 %v412, 1e-09
        %v415 = vrcp.pop %v413
        %v416 = vmul.f32 1.0, %v415
        %v417 = vrcp.pop %v414
        %v418 = vmul.f32 1.0, %v417
        %v419 = vmul.f32 %v405, 0.009389464
        %v420 = vmul.f32 %v407, 0.009389464
        %v421 = vmul.f32 %v406, 0.009389464
        %v422 = vmul.f32 %v408, 0.009389464
        %v423 = vmul.f32 %v405, 0.0020289666
        %v424 = vmul.f32 %v407, 0.0020289666
        %v425 = vmul.f32 %v406, 0.0020289666
        %v426 = vmul.f32 %v408, 0.0020289666
        %v427 = vmul.f32 %v405, -0.057657376
        %v428 = vmul.f32 %v407, -0.057657376
        %v429 = vmul.f32 %v406, -0.057657376
        %v430 = vmul.f32 %v408, -0.057657376
        %435 = vrot.lane.b32.xlu0 %v427, 1
        %v436 = vpop.permute.xlu0 %435
        %437 = vrot.lane.b32.xlu0 %v428, 1
        %v438 = vpop.permute.xlu0 %437
        %439 = vrot.lane.b32.xlu0 %v429, 1
        %v440 = vpop.permute.xlu0 %439
        %441 = vrot.lane.b32.xlu0 %v430, 1
        %v442 = vpop.permute.xlu0 %441
        %vm443 = vcmask 7168
        %v444 = vsel %vm443, %v436, %v438
        %v445 = vsel %vm443, %v440, %v442
        %v450 = vadd.f32 %v419, %v436
        %v451 = vadd.f32 %v420, %v444
        %v452 = vadd.f32 %v421, %v440
        %v453 = vadd.f32 %v422, %v445
        %v454 = vmul.f32 %v405, -0.025543464
        %v455 = vmul.f32 %v407, -0.025543464
        %v456 = vmul.f32 %v406, -0.025543464
        %v457 = vmul.f32 %v408, -0.025543464
        %462 = vrot.lane.b32.xlu0 %v454, 1
        %v463 = vpop.permute.xlu0 %462
        %464 = vrot.lane.b32.xlu0 %v455, 1
        %v465 = vpop.permute.xlu0 %464
        %466 = vrot.lane.b32.xlu0 %v456, 1
        %v467 = vpop.permute.xlu0 %466
        %468 = vrot.lane.b32.xlu0 %v457, 1
        %v469 = vpop.permute.xlu0 %468
        %v470 = vsel %vm443, %v463, %v465
        %v471 = vsel %vm443, %v467, %v469
        %v476 = vadd.f32 %v423, %v463
        %v477 = vadd.f32 %v424, %v470
        %v478 = vadd.f32 %v425, %v467
        %v479 = vadd.f32 %v426, %v471
        %v480 = vmul.f32 %v405, 0.4432098
        %v481 = vmul.f32 %v407, 0.4432098
        %v482 = vmul.f32 %v406, 0.4432098
        %v483 = vmul.f32 %v408, 0.4432098
        %488 = vrot.lane.b32.xlu0 %v480, 2
        %v489 = vpop.permute.xlu0 %488
        %490 = vrot.lane.b32.xlu0 %v481, 2
        %v491 = vpop.permute.xlu0 %490
        %492 = vrot.lane.b32.xlu0 %v482, 2
        %v493 = vpop.permute.xlu0 %492
        %494 = vrot.lane.b32.xlu0 %v483, 2
        %v495 = vpop.permute.xlu0 %494
        %vm496 = vcmask 15360
        %v497 = vsel %vm496, %v489, %v491
        %v498 = vsel %vm496, %v493, %v495
        %v503 = vadd.f32 %v450, %v489
        %v504 = vadd.f32 %v451, %v497
        %v505 = vadd.f32 %v452, %v493
        %v506 = vadd.f32 %v453, %v498
        %v507 = vmul.f32 %v405, 0.12857261
        %v508 = vmul.f32 %v407, 0.12857261
        %v509 = vmul.f32 %v406, 0.12857261
        %v510 = vmul.f32 %v408, 0.12857261
        %515 = vrot.lane.b32.xlu0 %v507, 2
        %v516 = vpop.permute.xlu0 %515
        %517 = vrot.lane.b32.xlu0 %v508, 2
        %v518 = vpop.permute.xlu0 %517
        %519 = vrot.lane.b32.xlu0 %v509, 2
        %v520 = vpop.permute.xlu0 %519
        %521 = vrot.lane.b32.xlu0 %v510, 2
        %v522 = vpop.permute.xlu0 %521
        %v523 = vsel %vm496, %v516, %v518
        %v524 = vsel %vm496, %v520, %v522
        %v529 = vadd.f32 %v476, %v516
        %v530 = vadd.f32 %v477, %v523
        %v531 = vadd.f32 %v478, %v520
        %v532 = vadd.f32 %v479, %v524
        %533 = vrot.lane.b32.xlu0 %v507, 3
        %v534 = vpop.permute.xlu0 %533
        %535 = vrot.lane.b32.xlu0 %v508, 3
        %v536 = vpop.permute.xlu0 %535
        %537 = vrot.lane.b32.xlu0 %v509, 3
        %v538 = vpop.permute.xlu0 %537
        %539 = vrot.lane.b32.xlu0 %v510, 3
        %v540 = vpop.permute.xlu0 %539
        %vm541 = vcmask 23552
        %v542 = vsel %vm541, %v534, %v536
        %v543 = vsel %vm541, %v538, %v540
        %v548 = vadd.f32 %v503, %v534
        %v549 = vadd.f32 %v504, %v542
        %v550 = vadd.f32 %v505, %v538
        %v551 = vadd.f32 %v506, %v543
        %552 = vrot.lane.b32.xlu0 %v480, 3
        %v553 = vpop.permute.xlu0 %552
        %554 = vrot.lane.b32.xlu0 %v481, 3
        %v555 = vpop.permute.xlu0 %554
        %556 = vrot.lane.b32.xlu0 %v482, 3
        %v557 = vpop.permute.xlu0 %556
        %558 = vrot.lane.b32.xlu0 %v483, 3
        %v559 = vpop.permute.xlu0 %558
        %v560 = vsel %vm541, %v553, %v555
        %v561 = vsel %vm541, %v557, %v559
        %v566 = vadd.f32 %v529, %v553
        %v567 = vadd.f32 %v530, %v560
        %v568 = vadd.f32 %v531, %v557
        %v569 = vadd.f32 %v532, %v561
        %570 = vrot.lane.b32.xlu0 %v454, 4
        %v571 = vpop.permute.xlu0 %570
        %572 = vrot.lane.b32.xlu0 %v455, 4
        %v573 = vpop.permute.xlu0 %572
        %574 = vrot.lane.b32.xlu0 %v456, 4
        %v575 = vpop.permute.xlu0 %574
        %576 = vrot.lane.b32.xlu0 %v457, 4
        %v577 = vpop.permute.xlu0 %576
        %vm578 = vcmask 31744
        %v579 = vsel %vm578, %v571, %v573
        %v580 = vsel %vm578, %v575, %v577
        %v585 = vadd.f32 %v548, %v571
        %v586 = vadd.f32 %v549, %v579
        %v587 = vadd.f32 %v550, %v575
        %v588 = vadd.f32 %v551, %v580
        %589 = vrot.lane.b32.xlu0 %v427, 4
        %v590 = vpop.permute.xlu0 %589
        %591 = vrot.lane.b32.xlu0 %v428, 4
        %v592 = vpop.permute.xlu0 %591
        %593 = vrot.lane.b32.xlu0 %v429, 4
        %v594 = vpop.permute.xlu0 %593
        %595 = vrot.lane.b32.xlu0 %v430, 4
        %v596 = vpop.permute.xlu0 %595
        %v597 = vsel %vm578, %v590, %v592
        %v598 = vsel %vm578, %v594, %v596
        %v603 = vadd.f32 %v566, %v590
        %v604 = vadd.f32 %v567, %v597
        %v605 = vadd.f32 %v568, %v594
        %v606 = vadd.f32 %v569, %v598
        %611 = vrot.lane.b32.xlu0 %v423, 5
        %v612 = vpop.permute.xlu0 %611
        %613 = vrot.lane.b32.xlu0 %v424, 5
        %v614 = vpop.permute.xlu0 %613
        %615 = vrot.lane.b32.xlu0 %v425, 5
        %v616 = vpop.permute.xlu0 %615
        %617 = vrot.lane.b32.xlu0 %v426, 5
        %v618 = vpop.permute.xlu0 %617
        %vm619 = vcmask 39936
        %v620 = vsel %vm619, %v612, %v614
        %v621 = vsel %vm619, %v616, %v618
        %v626 = vadd.f32 %v585, %v612
        %v627 = vadd.f32 %v586, %v620
        %v628 = vadd.f32 %v587, %v616
        %v629 = vadd.f32 %v588, %v621
        %634 = vrot.lane.b32.xlu0 %v419, 5
        %v635 = vpop.permute.xlu0 %634
        %636 = vrot.lane.b32.xlu0 %v420, 5
        %v637 = vpop.permute.xlu0 %636
        %638 = vrot.lane.b32.xlu0 %v421, 5
        %v639 = vpop.permute.xlu0 %638
        %640 = vrot.lane.b32.xlu0 %v422, 5
        %v641 = vpop.permute.xlu0 %640
        %v642 = vsel %vm619, %v635, %v637
        %v643 = vsel %vm619, %v639, %v641
        %v648 = vadd.f32 %v603, %v635
        %v649 = vadd.f32 %v604, %v642
        %v650 = vadd.f32 %v605, %v639
        %v651 = vadd.f32 %v606, %v643
        %v652 = vmul.f32 %v626, 2.0
        %v653 = vmul.f32 %v627, 2.0
        %v654 = vmul.f32 %v628, 2.0
        %v655 = vmul.f32 %v629, 2.0
        %v656 = vmul.f32 %v648, 2.0
        %v657 = vmul.f32 %v649, 2.0
        %v658 = vmul.f32 %v650, 2.0
        %v659 = vmul.f32 %v651, 2.0
        %661 = vset.pattern.permute.xlu0 0
        %662 = vperm.xlu0 %661, %v409
        %v663 = vpop.permute.xlu0 %662
        %666 = vset.pattern.permute.xlu0 0
        %667 = vperm.xlu0 %666, %v410
        %v668 = vpop.permute.xlu0 %667
        %v670 = vmul.f32 %v663, %v652
        %v671 = vmul.f32 %v663, %v653
        %v672 = vmul.f32 %v668, %v654
        %v673 = vmul.f32 %v668, %v655
        %v674 = vand.u32 2147483647, %v670
        %vm675 = vcmp.le.f32.partialorder %v674, 0.7853982
        %vm676 = vcmp.lt.s32.totalorder %v670, 0
        %v677 = vand.u32 %v670, 2139095040
        %v678 = vshrl.u32 %v677, 23
        %v679 = vsub.s32 %v678, 127
        %v680 = vand.u32 2147483647, %v670
        %v681 = vand.u32 %v680, 8388607
        %v682 = vor.u32 %v681, 8388608
        %v683 = vsub.s32 0, %v682
        %v684 = vadd.s32 %v679, 1
        %vm685 = vcmp.gt.s32.totalorder %v684, 0
        %v686 = vsel %vm685, %v684, 0
        %v687 = vshrl.u32 %v686, 5
        %v688 = vand.u32 %v686, 31
        %v689 = vsub.s32 32, %v688
        %v690 = vshrl.u32 683565275, %v689
        %v691 = vshll.u32 683565275, %v688
        %v692 = vshrl.u32 2475754826, %v689
        %v693 = vor.u32 %v691, %v692
        %v694 = vshll.u32 2475754826, %v688
        %v695 = vshrl.u32 2131351028, %v689
        %v696 = vor.u32 %v694, %v695
        %v697 = vshll.u32 2131351028, %v688
        %v698 = vshrl.u32 2102212464, %v689
        %v699 = vor.u32 %v697, %v698
        %v700 = vshll.u32 2102212464, %v688
        %v701 = vshrl.u32 920167782, %v689
        %v702 = vor.u32 %v700, %v701
        %v703 = vshll.u32 920167782, %v688
        %v704 = vshrl.u32 1326507024, %v689
        %v705 = vor.u32 %v703, %v704
        %vm706 = vcmp.lt.s32.totalorder %v687, 1
        %vm707 = vcmp.lt.s32.totalorder %v687, 2
        %vm708 = vcmp.lt.s32.totalorder %v687, 3
        %vm709 = vcmp.lt.s32.totalorder %v687, 4
        %v710 = vsel %vm706, %v690, %v693
        %v711 = vsel %vm709, %v699, 2102212464
        %v712 = vsel %vm708, %v696, %v711
        %v713 = vsel %vm707, %v710, %v712
        %v714 = vsel %vm706, %v693, %v696
        %v715 = vsel %vm709, %v702, 920167782
        %v716 = vsel %vm708, %v699, %v715
        %v717 = vsel %vm707, %v714, %v716
        %v718 = vsel %vm706, %v696, %v699
        %v719 = vsel %vm709, %v705, 1326507024
        %v720 = vsel %vm708, %v702, %v719
        %v721 = vsel %vm707, %v718, %v720
        %v722 = vshll.u32 %v682, 8
        %v723 = vmul.u32.u64.compose %v722, %v721
        %v724 = vextract.low.u32 %v723
        %v725 = vextract.high.u32 %v723
        %v726 = vmul.u32.u64.compose %v722, %v717
        %v727 = vextract.low.u32 %v726
        %v728 = vextract.high.u32 %v726
        %v729 = vmul.u32 %v722, %v713
        %v730 = vadd.s32 %v725, %v727
        %vm731 = vc.u32 %v725, %v727
        %v732 = vadd.s32 %v728, 1
        %v733 = vsel %vm731, %v732, %v728
        %v734 = vadd.s32 %v729, %v733
        %v735 = vadd.s32 %v734, 536870912
        %v736 = vshrl.u32 %v735, 30
        %v737 = vshll.u32 %v736, 30
        %v738 = vsub.s32 %v734, %v737
        %vm739 = vcmp.lt.s32.totalorder %v738, 0
        %v740 = vsub.s32 0, %v738
        %v741 = vsel %vm739, %v740, %v738
        %v742 = vclz %v741
        %v743 = vsub.s32 %v742, 2
        %vm744 = vcmp.gt.s32.totalorder 0, %v743
        %v745 = vsel %vm744, 0, %v743
        %v746 = vsub.s32 32, %v745
        %v747 = vshll.u32 %v738, %v745
        %v748 = vshrl.u32 %v730, %v746
        %v749 = vor.u32 %v747, %v748
        %v750 = vsub.s32 4294967266, %v745
        %v751 = vadd.s32 %v750, 127
        %v752 = vshll.u32 %v751, 23
        %v753 = vor.u32 4788187, %v752
        %v754 = vand.u32 2147483647, %v753
        %v756 = vcvt.s32.f32 %v749
        %v757 = vmul.f32 %v756, %v754
        %v758 = vxor.u32 %v757, 2147483648
        %v759 = vsel %vm676, %v758, %v757
        %v760 = vsub.s32 4, %v736
        %v761 = vsel %vm676, %v760, %v736
        %v762 = vsel %vm675, %v670, %v759
        %v763 = vsel %vm675, 0, %v761
        %v764 = vcosq.f32.pop %v762
        %v765 = vsinq.f32.pop %v762
        %vm766 = vweird.f32 %v670
        %v767 = vadd.s32 %v763, 3
        %v768 = vand.u32 %v767, 3
        %vm769 = vcmp.lt.s32.totalorder %v768, 2
        %vm770 = vcmp.eq.s32.totalorder %v768, 0
        %v771 = vxor.u32 %v765, 2147483648
        %v772 = vsel %vm770, %v764, %v771
        %vm773 = vcmp.eq.s32.totalorder %v768, 2
        %v774 = vxor.u32 %v764, 2147483648
        %v775 = vsel %vm773, %v774, %v765
        %v776 = vsel %vm769, %v772, %v775
        %v777 = vsel %vm766, nan, %v776
        %v778 = vand.u32 2147483647, %v671
        %vm779 = vcmp.le.f32.partialorder %v778, 0.7853982
        %vm780 = vcmp.lt.s32.totalorder %v671, 0
        %v781 = vand.u32 %v671, 2139095040
        %v782 = vshrl.u32 %v781, 23
        %v783 = vsub.s32 %v782, 127
        %v784 = vand.u32 2147483647, %v671
        %v785 = vand.u32 %v784, 8388607
        %v786 = vor.u32 %v785, 8388608
        %v787 = vsub.s32 0, %v786
        %v788 = vadd.s32 %v783, 1
        %vm789 = vcmp.gt.s32.totalorder %v788, 0
        %v790 = vsel %vm789, %v788, 0
        %v791 = vshrl.u32 %v790, 5
        %v792 = vand.u32 %v790, 31
        %v793 = vsub.s32 32, %v792
        %v794 = vshrl.u32 683565275, %v793
        %v795 = vshll.u32 683565275, %v792
        %v796 = vshrl.u32 2475754826, %v793
        %v797 = vor.u32 %v795, %v796
        %v798 = vshll.u32 2475754826, %v792
        %v799 = vshrl.u32 2131351028, %v793
        %v800 = vor.u32 %v798, %v799
        %v801 = vshll.u32 2131351028, %v792
        %v802 = vshrl.u32 2102212464, %v793
        %v803 = vor.u32 %v801, %v802
        %v804 = vshll.u32 2102212464, %v792
        %v805 = vshrl.u32 920167782, %v793
        %v806 = vor.u32 %v804, %v805
        %v807 = vshll.u32 920167782, %v792
        %v808 = vshrl.u32 1326507024, %v793
        %v809 = vor.u32 %v807, %v808
        %vm810 = vcmp.lt.s32.totalorder %v791, 1
        %vm811 = vcmp.lt.s32.totalorder %v791, 2
        %vm812 = vcmp.lt.s32.totalorder %v791, 3
        %vm813 = vcmp.lt.s32.totalorder %v791, 4
        %v814 = vsel %vm810, %v794, %v797
        %v815 = vsel %vm813, %v803, 2102212464
        %v816 = vsel %vm812, %v800, %v815
        %v817 = vsel %vm811, %v814, %v816
        %v818 = vsel %vm810, %v797, %v800
        %v819 = vsel %vm813, %v806, 920167782
        %v820 = vsel %vm812, %v803, %v819
        %v821 = vsel %vm811, %v818, %v820
        %v822 = vsel %vm810, %v800, %v803
        %v823 = vsel %vm813, %v809, 1326507024
        %v824 = vsel %vm812, %v806, %v823
        %v825 = vsel %vm811, %v822, %v824
        %v826 = vshll.u32 %v786, 8
        %v827 = vmul.u32.u64.compose %v826, %v825
        %v828 = vextract.low.u32 %v827
        %v829 = vextract.high.u32 %v827
        %v830 = vmul.u32.u64.compose %v826, %v821
        %v831 = vextract.low.u32 %v830
        %v832 = vextract.high.u32 %v830
        %v833 = vmul.u32 %v826, %v817
        %v834 = vadd.s32 %v829, %v831
        %vm835 = vc.u32 %v829, %v831
        %v836 = vadd.s32 %v832, 1
        %v837 = vsel %vm835, %v836, %v832
        %v838 = vadd.s32 %v833, %v837
        %v839 = vadd.s32 %v838, 536870912
        %v840 = vshrl.u32 %v839, 30
        %v841 = vshll.u32 %v840, 30
        %v842 = vsub.s32 %v838, %v841
        %vm843 = vcmp.lt.s32.totalorder %v842, 0
        %v844 = vsub.s32 0, %v842
        %v845 = vsel %vm843, %v844, %v842
        %v846 = vclz %v845
        %v847 = vsub.s32 %v846, 2
        %vm848 = vcmp.gt.s32.totalorder 0, %v847
        %v849 = vsel %vm848, 0, %v847
        %v850 = vsub.s32 32, %v849
        %v851 = vshll.u32 %v842, %v849
        %v852 = vshrl.u32 %v834, %v850
        %v853 = vor.u32 %v851, %v852
        %v854 = vsub.s32 4294967266, %v849
        %v855 = vadd.s32 %v854, 127
        %v856 = vshll.u32 %v855, 23
        %v857 = vor.u32 4788187, %v856
        %v858 = vand.u32 2147483647, %v857
        %v860 = vcvt.s32.f32 %v853
        %v861 = vmul.f32 %v860, %v858
        %v862 = vxor.u32 %v861, 2147483648
        %v863 = vsel %vm780, %v862, %v861
        %v864 = vsub.s32 4, %v840
        %v865 = vsel %vm780, %v864, %v840
        %v866 = vsel %vm779, %v671, %v863
        %v867 = vsel %vm779, 0, %v865
        %v868 = vcosq.f32.pop %v866
        %v869 = vsinq.f32.pop %v866
        %vm870 = vweird.f32 %v671
        %v871 = vadd.s32 %v867, 3
        %v872 = vand.u32 %v871, 3
        %vm873 = vcmp.lt.s32.totalorder %v872, 2
        %vm874 = vcmp.eq.s32.totalorder %v872, 0
        %v875 = vxor.u32 %v869, 2147483648
        %v876 = vsel %vm874, %v868, %v875
        %vm877 = vcmp.eq.s32.totalorder %v872, 2
        %v878 = vxor.u32 %v868, 2147483648
        %v879 = vsel %vm877, %v878, %v869
        %v880 = vsel %vm873, %v876, %v879
        %v881 = vsel %vm870, nan, %v880
        %v882 = vand.u32 2147483647, %v672
        %vm883 = vcmp.le.f32.partialorder %v882, 0.7853982
        %vm884 = vcmp.lt.s32.totalorder %v672, 0
        %v885 = vand.u32 %v672, 2139095040
        %v886 = vshrl.u32 %v885, 23
        %v887 = vsub.s32 %v886, 127
        %v888 = vand.u32 2147483647, %v672
        %v889 = vand.u32 %v888, 8388607
        %v890 = vor.u32 %v889, 8388608
        %v891 = vsub.s32 0, %v890
        %v892 = vadd.s32 %v887, 1
        %vm893 = vcmp.gt.s32.totalorder %v892, 0
        %v894 = vsel %vm893, %v892, 0
        %v895 = vshrl.u32 %v894, 5
        %v896 = vand.u32 %v894, 31
        %v897 = vsub.s32 32, %v896
        %v898 = vshrl.u32 683565275, %v897
        %v899 = vshll.u32 683565275, %v896
        %v900 = vshrl.u32 2475754826, %v897
        %v901 = vor.u32 %v899, %v900
        %v902 = vshll.u32 2475754826, %v896
        %v903 = vshrl.u32 2131351028, %v897
        %v904 = vor.u32 %v902, %v903
        %v905 = vshll.u32 2131351028, %v896
        %v906 = vshrl.u32 2102212464, %v897
        %v907 = vor.u32 %v905, %v906
        %v908 = vshll.u32 2102212464, %v896
        %v909 = vshrl.u32 920167782, %v897
        %v910 = vor.u32 %v908, %v909
        %v911 = vshll.u32 920167782, %v896
        %v912 = vshrl.u32 1326507024, %v897
        %v913 = vor.u32 %v911, %v912
        %vm914 = vcmp.lt.s32.totalorder %v895, 1
        %vm915 = vcmp.lt.s32.totalorder %v895, 2
        %vm916 = vcmp.lt.s32.totalorder %v895, 3
        %vm917 = vcmp.lt.s32.totalorder %v895, 4
        %v918 = vsel %vm914, %v898, %v901
        %v919 = vsel %vm917, %v907, 2102212464
        %v920 = vsel %vm916, %v904, %v919
        %v921 = vsel %vm915, %v918, %v920
        %v922 = vsel %vm914, %v901, %v904
        %v923 = vsel %vm917, %v910, 920167782
        %v924 = vsel %vm916, %v907, %v923
        %v925 = vsel %vm915, %v922, %v924
        %v926 = vsel %vm914, %v904, %v907
        %v927 = vsel %vm917, %v913, 1326507024
        %v928 = vsel %vm916, %v910, %v927
        %v929 = vsel %vm915, %v926, %v928
        %v930 = vshll.u32 %v890, 8
        %v931 = vmul.u32.u64.compose %v930, %v929
        %v932 = vextract.low.u32 %v931
        %v933 = vextract.high.u32 %v931
        %v934 = vmul.u32.u64.compose %v930, %v925
        %v935 = vextract.low.u32 %v934
        %v936 = vextract.high.u32 %v934
        %v937 = vmul.u32 %v930, %v921
        %v938 = vadd.s32 %v933, %v935
        %vm939 = vc.u32 %v933, %v935
        %v940 = vadd.s32 %v936, 1
        %v941 = vsel %vm939, %v940, %v936
        %v942 = vadd.s32 %v937, %v941
        %v943 = vadd.s32 %v942, 536870912
        %v944 = vshrl.u32 %v943, 30
        %v945 = vshll.u32 %v944, 30
        %v946 = vsub.s32 %v942, %v945
        %vm947 = vcmp.lt.s32.totalorder %v946, 0
        %v948 = vsub.s32 0, %v946
        %v949 = vsel %vm947, %v948, %v946
        %v950 = vclz %v949
        %v951 = vsub.s32 %v950, 2
        %vm952 = vcmp.gt.s32.totalorder 0, %v951
        %v953 = vsel %vm952, 0, %v951
        %v954 = vsub.s32 32, %v953
        %v955 = vshll.u32 %v946, %v953
        %v956 = vshrl.u32 %v938, %v954
        %v957 = vor.u32 %v955, %v956
        %v958 = vsub.s32 4294967266, %v953
        %v959 = vadd.s32 %v958, 127
        %v960 = vshll.u32 %v959, 23
        %v961 = vor.u32 4788187, %v960
        %v962 = vand.u32 2147483647, %v961
        %v964 = vcvt.s32.f32 %v957
        %v965 = vmul.f32 %v964, %v962
        %v966 = vxor.u32 %v965, 2147483648
        %v967 = vsel %vm884, %v966, %v965
        %v968 = vsub.s32 4, %v944
        %v969 = vsel %vm884, %v968, %v944
        %v970 = vsel %vm883, %v672, %v967
        %v971 = vsel %vm883, 0, %v969
        %v972 = vcosq.f32.pop %v970
        %v973 = vsinq.f32.pop %v970
        %vm974 = vweird.f32 %v672
        %v975 = vadd.s32 %v971, 3
        %v976 = vand.u32 %v975, 3
        %vm977 = vcmp.lt.s32.totalorder %v976, 2
        %vm978 = vcmp.eq.s32.totalorder %v976, 0
        %v979 = vxor.u32 %v973, 2147483648
        %v980 = vsel %vm978, %v972, %v979
        %vm981 = vcmp.eq.s32.totalorder %v976, 2
        %v982 = vxor.u32 %v972, 2147483648
        %v983 = vsel %vm981, %v982, %v973
        %v984 = vsel %vm977, %v980, %v983
        %v985 = vsel %vm974, nan, %v984
        %v986 = vand.u32 2147483647, %v673
        %vm987 = vcmp.le.f32.partialorder %v986, 0.7853982
        %vm988 = vcmp.lt.s32.totalorder %v673, 0
        %v989 = vand.u32 %v673, 2139095040
        %v990 = vshrl.u32 %v989, 23
        %v991 = vsub.s32 %v990, 127
        %v992 = vand.u32 2147483647, %v673
        %v993 = vand.u32 %v992, 8388607
        %v994 = vor.u32 %v993, 8388608
        %v995 = vsub.s32 0, %v994
        %v996 = vadd.s32 %v991, 1
        %vm997 = vcmp.gt.s32.totalorder %v996, 0
        %v998 = vsel %vm997, %v996, 0
        %v999 = vshrl.u32 %v998, 5
        %v1000 = vand.u32 %v998, 31
        %v1001 = vsub.s32 32, %v1000
        %v1002 = vshrl.u32 683565275, %v1001
        %v1003 = vshll.u32 683565275, %v1000
        %v1004 = vshrl.u32 2475754826, %v1001
        %v1005 = vor.u32 %v1003, %v1004
        %v1006 = vshll.u32 2475754826, %v1000
        %v1007 = vshrl.u32 2131351028, %v1001
        %v1008 = vor.u32 %v1006, %v1007
        %v1009 = vshll.u32 2131351028, %v1000
        %v1010 = vshrl.u32 2102212464, %v1001
        %v1011 = vor.u32 %v1009, %v1010
        %v1012 = vshll.u32 2102212464, %v1000
        %v1013 = vshrl.u32 920167782, %v1001
        %v1014 = vor.u32 %v1012, %v1013
        %v1015 = vshll.u32 920167782, %v1000
        %v1016 = vshrl.u32 1326507024, %v1001
        %v1017 = vor.u32 %v1015, %v1016
        %vm1018 = vcmp.lt.s32.totalorder %v999, 1
        %vm1019 = vcmp.lt.s32.totalorder %v999, 2
        %vm1020 = vcmp.lt.s32.totalorder %v999, 3
        %vm1021 = vcmp.lt.s32.totalorder %v999, 4
        %v1022 = vsel %vm1018, %v1002, %v1005
        %v1023 = vsel %vm1021, %v1011, 2102212464
        %v1024 = vsel %vm1020, %v1008, %v1023
        %v1025 = vsel %vm1019, %v1022, %v1024
        %v1026 = vsel %vm1018, %v1005, %v1008
        %v1027 = vsel %vm1021, %v1014, 920167782
        %v1028 = vsel %vm1020, %v1011, %v1027
        %v1029 = vsel %vm1019, %v1026, %v1028
        %v1030 = vsel %vm1018, %v1008, %v1011
        %v1031 = vsel %vm1021, %v1017, 1326507024
        %v1032 = vsel %vm1020, %v1014, %v1031
        %v1033 = vsel %vm1019, %v1030, %v1032
        %v1034 = vshll.u32 %v994, 8
        %v1035 = vmul.u32.u64.compose %v1034, %v1033
        %v1036 = vextract.low.u32 %v1035
        %v1037 = vextract.high.u32 %v1035
        %v1038 = vmul.u32.u64.compose %v1034, %v1029
        %v1039 = vextract.low.u32 %v1038
        %v1040 = vextract.high.u32 %v1038
        %v1041 = vmul.u32 %v1034, %v1025
        %v1042 = vadd.s32 %v1037, %v1039
        %vm1043 = vc.u32 %v1037, %v1039
        %v1044 = vadd.s32 %v1040, 1
        %v1045 = vsel %vm1043, %v1044, %v1040
        %v1046 = vadd.s32 %v1041, %v1045
        %v1047 = vadd.s32 %v1046, 536870912
        %v1048 = vshrl.u32 %v1047, 30
        %v1049 = vshll.u32 %v1048, 30
        %v1050 = vsub.s32 %v1046, %v1049
        %vm1051 = vcmp.lt.s32.totalorder %v1050, 0
        %v1052 = vsub.s32 0, %v1050
        %v1053 = vsel %vm1051, %v1052, %v1050
        %v1054 = vclz %v1053
        %v1055 = vsub.s32 %v1054, 2
        %vm1056 = vcmp.gt.s32.totalorder 0, %v1055
        %v1057 = vsel %vm1056, 0, %v1055
        %v1058 = vsub.s32 32, %v1057
        %v1059 = vshll.u32 %v1050, %v1057
        %v1060 = vshrl.u32 %v1042, %v1058
        %v1061 = vor.u32 %v1059, %v1060
        %v1062 = vsub.s32 4294967266, %v1057
        %v1063 = vadd.s32 %v1062, 127
        %v1064 = vshll.u32 %v1063, 23
        %v1065 = vor.u32 4788187, %v1064
        %v1066 = vand.u32 2147483647, %v1065
        %v1068 = vcvt.s32.f32 %v1061
        %v1069 = vmul.f32 %v1068, %v1066
        %v1070 = vxor.u32 %v1069, 2147483648
        %v1071 = vsel %vm988, %v1070, %v1069
        %v1072 = vsub.s32 4, %v1048
        %v1073 = vsel %vm988, %v1072, %v1048
        %v1074 = vsel %vm987, %v673, %v1071
        %v1075 = vsel %vm987, 0, %v1073
        %v1076 = vcosq.f32.pop %v1074
        %v1077 = vsinq.f32.pop %v1074
        %vm1078 = vweird.f32 %v673
        %v1079 = vadd.s32 %v1075, 3
        %v1080 = vand.u32 %v1079, 3
        %vm1081 = vcmp.lt.s32.totalorder %v1080, 2
        %vm1082 = vcmp.eq.s32.totalorder %v1080, 0
        %v1083 = vxor.u32 %v1077, 2147483648
        %v1084 = vsel %vm1082, %v1076, %v1083
        %vm1085 = vcmp.eq.s32.totalorder %v1080, 2
        %v1086 = vxor.u32 %v1076, 2147483648
        %v1087 = vsel %vm1085, %v1086, %v1077
        %v1088 = vsel %vm1081, %v1084, %v1087
        %v1089 = vsel %vm1078, nan, %v1088
        %v1090 = vmul.f32 %v663, %v656
        %v1091 = vmul.f32 %v663, %v657
        %v1092 = vmul.f32 %v668, %v658
        %v1093 = vmul.f32 %v668, %v659
        %v1094 = vand.u32 2147483647, %v1090
        %vm1095 = vcmp.le.f32.partialorder %v1094, 0.7853982
        %vm1096 = vcmp.lt.s32.totalorder %v1090, 0
        %v1097 = vand.u32 %v1090, 2139095040
        %v1098 = vshrl.u32 %v1097, 23
        %v1099 = vsub.s32 %v1098, 127
        %v1100 = vand.u32 2147483647, %v1090
        %v1101 = vand.u32 %v1100, 8388607
        %v1102 = vor.u32 %v1101, 8388608
        %v1103 = vsub.s32 0, %v1102
        %v1104 = vadd.s32 %v1099, 1
        %vm1105 = vcmp.gt.s32.totalorder %v1104, 0
        %v1106 = vsel %vm1105, %v1104, 0
        %v1107 = vshrl.u32 %v1106, 5
        %v1108 = vand.u32 %v1106, 31
        %v1109 = vsub.s32 32, %v1108
        %v1110 = vshrl.u32 683565275, %v1109
        %v1111 = vshll.u32 683565275, %v1108
        %v1112 = vshrl.u32 2475754826, %v1109
        %v1113 = vor.u32 %v1111, %v1112
        %v1114 = vshll.u32 2475754826, %v1108
        %v1115 = vshrl.u32 2131351028, %v1109
        %v1116 = vor.u32 %v1114, %v1115
        %v1117 = vshll.u32 2131351028, %v1108
        %v1118 = vshrl.u32 2102212464, %v1109
        %v1119 = vor.u32 %v1117, %v1118
        %v1120 = vshll.u32 2102212464, %v1108
        %v1121 = vshrl.u32 920167782, %v1109
        %v1122 = vor.u32 %v1120, %v1121
        %v1123 = vshll.u32 920167782, %v1108
        %v1124 = vshrl.u32 1326507024, %v1109
        %v1125 = vor.u32 %v1123, %v1124
        %vm1126 = vcmp.lt.s32.totalorder %v1107, 1
        %vm1127 = vcmp.lt.s32.totalorder %v1107, 2
        %vm1128 = vcmp.lt.s32.totalorder %v1107, 3
        %vm1129 = vcmp.lt.s32.totalorder %v1107, 4
        %v1130 = vsel %vm1126, %v1110, %v1113
        %v1131 = vsel %vm1129, %v1119, 2102212464
        %v1132 = vsel %vm1128, %v1116, %v1131
        %v1133 = vsel %vm1127, %v1130, %v1132
        %v1134 = vsel %vm1126, %v1113, %v1116
        %v1135 = vsel %vm1129, %v1122, 920167782
        %v1136 = vsel %vm1128, %v1119, %v1135
        %v1137 = vsel %vm1127, %v1134, %v1136
        %v1138 = vsel %vm1126, %v1116, %v1119
        %v1139 = vsel %vm1129, %v1125, 1326507024
        %v1140 = vsel %vm1128, %v1122, %v1139
        %v1141 = vsel %vm1127, %v1138, %v1140
        %v1142 = vshll.u32 %v1102, 8
        %v1143 = vmul.u32.u64.compose %v1142, %v1141
        %v1144 = vextract.low.u32 %v1143
        %v1145 = vextract.high.u32 %v1143
        %v1146 = vmul.u32.u64.compose %v1142, %v1137
        %v1147 = vextract.low.u32 %v1146
        %v1148 = vextract.high.u32 %v1146
        %v1149 = vmul.u32 %v1142, %v1133
        %v1150 = vadd.s32 %v1145, %v1147
        %vm1151 = vc.u32 %v1145, %v1147
        %v1152 = vadd.s32 %v1148, 1
        %v1153 = vsel %vm1151, %v1152, %v1148
        %v1154 = vadd.s32 %v1149, %v1153
        %v1155 = vadd.s32 %v1154, 536870912
        %v1156 = vshrl.u32 %v1155, 30
        %v1157 = vshll.u32 %v1156, 30
        %v1158 = vsub.s32 %v1154, %v1157
        %vm1159 = vcmp.lt.s32.totalorder %v1158, 0
        %v1160 = vsub.s32 0, %v1158
        %v1161 = vsel %vm1159, %v1160, %v1158
        %v1162 = vclz %v1161
        %v1163 = vsub.s32 %v1162, 2
        %vm1164 = vcmp.gt.s32.totalorder 0, %v1163
        %v1165 = vsel %vm1164, 0, %v1163
        %v1166 = vsub.s32 32, %v1165
        %v1167 = vshll.u32 %v1158, %v1165
        %v1168 = vshrl.u32 %v1150, %v1166
        %v1169 = vor.u32 %v1167, %v1168
        %v1170 = vsub.s32 4294967266, %v1165
        %v1171 = vadd.s32 %v1170, 127
        %v1172 = vshll.u32 %v1171, 23
        %v1173 = vor.u32 4788187, %v1172
        %v1174 = vand.u32 2147483647, %v1173
        %v1176 = vcvt.s32.f32 %v1169
        %v1177 = vmul.f32 %v1176, %v1174
        %v1178 = vxor.u32 %v1177, 2147483648
        %v1179 = vsel %vm1096, %v1178, %v1177
        %v1180 = vsub.s32 4, %v1156
        %v1181 = vsel %vm1096, %v1180, %v1156
        %v1182 = vsel %vm1095, %v1090, %v1179
        %v1183 = vsel %vm1095, 0, %v1181
        %v1184 = vcosq.f32.pop %v1182
        %v1185 = vsinq.f32.pop %v1182
        %vm1186 = vweird.f32 %v1090
        %v1187 = vadd.s32 %v1183, 3
        %v1188 = vand.u32 %v1187, 3
        %vm1189 = vcmp.lt.s32.totalorder %v1188, 2
        %vm1190 = vcmp.eq.s32.totalorder %v1188, 0
        %v1191 = vxor.u32 %v1185, 2147483648
        %v1192 = vsel %vm1190, %v1184, %v1191
        %vm1193 = vcmp.eq.s32.totalorder %v1188, 2
        %v1194 = vxor.u32 %v1184, 2147483648
        %v1195 = vsel %vm1193, %v1194, %v1185
        %v1196 = vsel %vm1189, %v1192, %v1195
        %v1197 = vsel %vm1186, nan, %v1196
        %v1198 = vand.u32 2147483647, %v1091
        %vm1199 = vcmp.le.f32.partialorder %v1198, 0.7853982
        %vm1200 = vcmp.lt.s32.totalorder %v1091, 0
        %v1201 = vand.u32 %v1091, 2139095040
        %v1202 = vshrl.u32 %v1201, 23
        %v1203 = vsub.s32 %v1202, 127
        %v1204 = vand.u32 2147483647, %v1091
        %v1205 = vand.u32 %v1204, 8388607
        %v1206 = vor.u32 %v1205, 8388608
        %v1207 = vsub.s32 0, %v1206
        %v1208 = vadd.s32 %v1203, 1
        %vm1209 = vcmp.gt.s32.totalorder %v1208, 0
        %v1210 = vsel %vm1209, %v1208, 0
        %v1211 = vshrl.u32 %v1210, 5
        %v1212 = vand.u32 %v1210, 31
        %v1213 = vsub.s32 32, %v1212
        %v1214 = vshrl.u32 683565275, %v1213
        %v1215 = vshll.u32 683565275, %v1212
        %v1216 = vshrl.u32 2475754826, %v1213
        %v1217 = vor.u32 %v1215, %v1216
        %v1218 = vshll.u32 2475754826, %v1212
        %v1219 = vshrl.u32 2131351028, %v1213
        %v1220 = vor.u32 %v1218, %v1219
        %v1221 = vshll.u32 2131351028, %v1212
        %v1222 = vshrl.u32 2102212464, %v1213
        %v1223 = vor.u32 %v1221, %v1222
        %v1224 = vshll.u32 2102212464, %v1212
        %v1225 = vshrl.u32 920167782, %v1213
        %v1226 = vor.u32 %v1224, %v1225
        %v1227 = vshll.u32 920167782, %v1212
        %v1228 = vshrl.u32 1326507024, %v1213
        %v1229 = vor.u32 %v1227, %v1228
        %vm1230 = vcmp.lt.s32.totalorder %v1211, 1
        %vm1231 = vcmp.lt.s32.totalorder %v1211, 2
        %vm1232 = vcmp.lt.s32.totalorder %v1211, 3
        %vm1233 = vcmp.lt.s32.totalorder %v1211, 4
        %v1234 = vsel %vm1230, %v1214, %v1217
        %v1235 = vsel %vm1233, %v1223, 2102212464
        %v1236 = vsel %vm1232, %v1220, %v1235
        %v1237 = vsel %vm1231, %v1234, %v1236
        %v1238 = vsel %vm1230, %v1217, %v1220
        %v1239 = vsel %vm1233, %v1226, 920167782
        %v1240 = vsel %vm1232, %v1223, %v1239
        %v1241 = vsel %vm1231, %v1238, %v1240
        %v1242 = vsel %vm1230, %v1220, %v1223
        %v1243 = vsel %vm1233, %v1229, 1326507024
        %v1244 = vsel %vm1232, %v1226, %v1243
        %v1245 = vsel %vm1231, %v1242, %v1244
        %v1246 = vshll.u32 %v1206, 8
        %v1247 = vmul.u32.u64.compose %v1246, %v1245
        %v1248 = vextract.low.u32 %v1247
        %v1249 = vextract.high.u32 %v1247
        %v1250 = vmul.u32.u64.compose %v1246, %v1241
        %v1251 = vextract.low.u32 %v1250
        %v1252 = vextract.high.u32 %v1250
        %v1253 = vmul.u32 %v1246, %v1237
        %v1254 = vadd.s32 %v1249, %v1251
        %vm1255 = vc.u32 %v1249, %v1251
        %v1256 = vadd.s32 %v1252, 1
        %v1257 = vsel %vm1255, %v1256, %v1252
        %v1258 = vadd.s32 %v1253, %v1257
        %v1259 = vadd.s32 %v1258, 536870912
        %v1260 = vshrl.u32 %v1259, 30
        %v1261 = vshll.u32 %v1260, 30
        %v1262 = vsub.s32 %v1258, %v1261
        %vm1263 = vcmp.lt.s32.totalorder %v1262, 0
        %v1264 = vsub.s32 0, %v1262
        %v1265 = vsel %vm1263, %v1264, %v1262
        %v1266 = vclz %v1265
        %v1267 = vsub.s32 %v1266, 2
        %vm1268 = vcmp.gt.s32.totalorder 0, %v1267
        %v1269 = vsel %vm1268, 0, %v1267
        %v1270 = vsub.s32 32, %v1269
        %v1271 = vshll.u32 %v1262, %v1269
        %v1272 = vshrl.u32 %v1254, %v1270
        %v1273 = vor.u32 %v1271, %v1272
        %v1274 = vsub.s32 4294967266, %v1269
        %v1275 = vadd.s32 %v1274, 127
        %v1276 = vshll.u32 %v1275, 23
        %v1277 = vor.u32 4788187, %v1276
        %v1278 = vand.u32 2147483647, %v1277
        %v1280 = vcvt.s32.f32 %v1273
        %v1281 = vmul.f32 %v1280, %v1278
        %v1282 = vxor.u32 %v1281, 2147483648
        %v1283 = vsel %vm1200, %v1282, %v1281
        %v1284 = vsub.s32 4, %v1260
        %v1285 = vsel %vm1200, %v1284, %v1260
        %v1286 = vsel %vm1199, %v1091, %v1283
        %v1287 = vsel %vm1199, 0, %v1285
        %v1288 = vcosq.f32.pop %v1286
        %v1289 = vsinq.f32.pop %v1286
        %vm1290 = vweird.f32 %v1091
        %v1291 = vadd.s32 %v1287, 3
        %v1292 = vand.u32 %v1291, 3
        %vm1293 = vcmp.lt.s32.totalorder %v1292, 2
        %vm1294 = vcmp.eq.s32.totalorder %v1292, 0
        %v1295 = vxor.u32 %v1289, 2147483648
        %v1296 = vsel %vm1294, %v1288, %v1295
        %vm1297 = vcmp.eq.s32.totalorder %v1292, 2
        %v1298 = vxor.u32 %v1288, 2147483648
        %v1299 = vsel %vm1297, %v1298, %v1289
        %v1300 = vsel %vm1293, %v1296, %v1299
        %v1301 = vsel %vm1290, nan, %v1300
        %v1302 = vand.u32 2147483647, %v1092
        %vm1303 = vcmp.le.f32.partialorder %v1302, 0.7853982
        %vm1304 = vcmp.lt.s32.totalorder %v1092, 0
        %v1305 = vand.u32 %v1092, 2139095040
        %v1306 = vshrl.u32 %v1305, 23
        %v1307 = vsub.s32 %v1306, 127
        %v1308 = vand.u32 2147483647, %v1092
        %v1309 = vand.u32 %v1308, 8388607
        %v1310 = vor.u32 %v1309, 8388608
        %v1311 = vsub.s32 0, %v1310
        %v1312 = vadd.s32 %v1307, 1
        %vm1313 = vcmp.gt.s32.totalorder %v1312, 0
        %v1314 = vsel %vm1313, %v1312, 0
        %v1315 = vshrl.u32 %v1314, 5
        %v1316 = vand.u32 %v1314, 31
        %v1317 = vsub.s32 32, %v1316
        %v1318 = vshrl.u32 683565275, %v1317
        %v1319 = vshll.u32 683565275, %v1316
        %v1320 = vshrl.u32 2475754826, %v1317
        %v1321 = vor.u32 %v1319, %v1320
        %v1322 = vshll.u32 2475754826, %v1316
        %v1323 = vshrl.u32 2131351028, %v1317
        %v1324 = vor.u32 %v1322, %v1323
        %v1325 = vshll.u32 2131351028, %v1316
        %v1326 = vshrl.u32 2102212464, %v1317
        %v1327 = vor.u32 %v1325, %v1326
        %v1328 = vshll.u32 2102212464, %v1316
        %v1329 = vshrl.u32 920167782, %v1317
        %v1330 = vor.u32 %v1328, %v1329
        %v1331 = vshll.u32 920167782, %v1316
        %v1332 = vshrl.u32 1326507024, %v1317
        %v1333 = vor.u32 %v1331, %v1332
        %vm1334 = vcmp.lt.s32.totalorder %v1315, 1
        %vm1335 = vcmp.lt.s32.totalorder %v1315, 2
        %vm1336 = vcmp.lt.s32.totalorder %v1315, 3
        %vm1337 = vcmp.lt.s32.totalorder %v1315, 4
        %v1338 = vsel %vm1334, %v1318, %v1321
        %v1339 = vsel %vm1337, %v1327, 2102212464
        %v1340 = vsel %vm1336, %v1324, %v1339
        %v1341 = vsel %vm1335, %v1338, %v1340
        %v1342 = vsel %vm1334, %v1321, %v1324
        %v1343 = vsel %vm1337, %v1330, 920167782
        %v1344 = vsel %vm1336, %v1327, %v1343
        %v1345 = vsel %vm1335, %v1342, %v1344
        %v1346 = vsel %vm1334, %v1324, %v1327
        %v1347 = vsel %vm1337, %v1333, 1326507024
        %v1348 = vsel %vm1336, %v1330, %v1347
        %v1349 = vsel %vm1335, %v1346, %v1348
        %v1350 = vshll.u32 %v1310, 8
        %v1351 = vmul.u32.u64.compose %v1350, %v1349
        %v1352 = vextract.low.u32 %v1351
        %v1353 = vextract.high.u32 %v1351
        %v1354 = vmul.u32.u64.compose %v1350, %v1345
        %v1355 = vextract.low.u32 %v1354
        %v1356 = vextract.high.u32 %v1354
        %v1357 = vmul.u32 %v1350, %v1341
        %v1358 = vadd.s32 %v1353, %v1355
        %vm1359 = vc.u32 %v1353, %v1355
        %v1360 = vadd.s32 %v1356, 1
        %v1361 = vsel %vm1359, %v1360, %v1356
        %v1362 = vadd.s32 %v1357, %v1361
        %v1363 = vadd.s32 %v1362, 536870912
        %v1364 = vshrl.u32 %v1363, 30
        %v1365 = vshll.u32 %v1364, 30
        %v1366 = vsub.s32 %v1362, %v1365
        %vm1367 = vcmp.lt.s32.totalorder %v1366, 0
        %v1368 = vsub.s32 0, %v1366
        %v1369 = vsel %vm1367, %v1368, %v1366
        %v1370 = vclz %v1369
        %v1371 = vsub.s32 %v1370, 2
        %vm1372 = vcmp.gt.s32.totalorder 0, %v1371
        %v1373 = vsel %vm1372, 0, %v1371
        %v1374 = vsub.s32 32, %v1373
        %v1375 = vshll.u32 %v1366, %v1373
        %v1376 = vshrl.u32 %v1358, %v1374
        %v1377 = vor.u32 %v1375, %v1376
        %v1378 = vsub.s32 4294967266, %v1373
        %v1379 = vadd.s32 %v1378, 127
        %v1380 = vshll.u32 %v1379, 23
        %v1381 = vor.u32 4788187, %v1380
        %v1382 = vand.u32 2147483647, %v1381
        %v1384 = vcvt.s32.f32 %v1377
        %v1385 = vmul.f32 %v1384, %v1382
        %v1386 = vxor.u32 %v1385, 2147483648
        %v1387 = vsel %vm1304, %v1386, %v1385
        %v1388 = vsub.s32 4, %v1364
        %v1389 = vsel %vm1304, %v1388, %v1364
        %v1390 = vsel %vm1303, %v1092, %v1387
        %v1391 = vsel %vm1303, 0, %v1389
        %v1392 = vcosq.f32.pop %v1390
        %v1393 = vsinq.f32.pop %v1390
        %vm1394 = vweird.f32 %v1092
        %v1395 = vadd.s32 %v1391, 3
        %v1396 = vand.u32 %v1395, 3
        %vm1397 = vcmp.lt.s32.totalorder %v1396, 2
        %vm1398 = vcmp.eq.s32.totalorder %v1396, 0
        %v1399 = vxor.u32 %v1393, 2147483648
        %v1400 = vsel %vm1398, %v1392, %v1399
        %vm1401 = vcmp.eq.s32.totalorder %v1396, 2
        %v1402 = vxor.u32 %v1392, 2147483648
        %v1403 = vsel %vm1401, %v1402, %v1393
        %v1404 = vsel %vm1397, %v1400, %v1403
        %v1405 = vsel %vm1394, nan, %v1404
        %v1406 = vand.u32 2147483647, %v1093
        %vm1407 = vcmp.le.f32.partialorder %v1406, 0.7853982
        %vm1408 = vcmp.lt.s32.totalorder %v1093, 0
        %v1409 = vand.u32 %v1093, 2139095040
        %v1410 = vshrl.u32 %v1409, 23
        %v1411 = vsub.s32 %v1410, 127
        %v1412 = vand.u32 2147483647, %v1093
        %v1413 = vand.u32 %v1412, 8388607
        %v1414 = vor.u32 %v1413, 8388608
        %v1415 = vsub.s32 0, %v1414
        %v1416 = vadd.s32 %v1411, 1
        %vm1417 = vcmp.gt.s32.totalorder %v1416, 0
        %v1418 = vsel %vm1417, %v1416, 0
        %v1419 = vshrl.u32 %v1418, 5
        %v1420 = vand.u32 %v1418, 31
        %v1421 = vsub.s32 32, %v1420
        %v1422 = vshrl.u32 683565275, %v1421
        %v1423 = vshll.u32 683565275, %v1420
        %v1424 = vshrl.u32 2475754826, %v1421
        %v1425 = vor.u32 %v1423, %v1424
        %v1426 = vshll.u32 2475754826, %v1420
        %v1427 = vshrl.u32 2131351028, %v1421
        %v1428 = vor.u32 %v1426, %v1427
        %v1429 = vshll.u32 2131351028, %v1420
        %v1430 = vshrl.u32 2102212464, %v1421
        %v1431 = vor.u32 %v1429, %v1430
        %v1432 = vshll.u32 2102212464, %v1420
        %v1433 = vshrl.u32 920167782, %v1421
        %v1434 = vor.u32 %v1432, %v1433
        %v1435 = vshll.u32 920167782, %v1420
        %v1436 = vshrl.u32 1326507024, %v1421
        %v1437 = vor.u32 %v1435, %v1436
        %vm1438 = vcmp.lt.s32.totalorder %v1419, 1
        %vm1439 = vcmp.lt.s32.totalorder %v1419, 2
        %vm1440 = vcmp.lt.s32.totalorder %v1419, 3
        %vm1441 = vcmp.lt.s32.totalorder %v1419, 4
        %v1442 = vsel %vm1438, %v1422, %v1425
        %v1443 = vsel %vm1441, %v1431, 2102212464
        %v1444 = vsel %vm1440, %v1428, %v1443
        %v1445 = vsel %vm1439, %v1442, %v1444
        %v1446 = vsel %vm1438, %v1425, %v1428
        %v1447 = vsel %vm1441, %v1434, 920167782
        %v1448 = vsel %vm1440, %v1431, %v1447
        %v1449 = vsel %vm1439, %v1446, %v1448
        %v1450 = vsel %vm1438, %v1428, %v1431
        %v1451 = vsel %vm1441, %v1437, 1326507024
        %v1452 = vsel %vm1440, %v1434, %v1451
        %v1453 = vsel %vm1439, %v1450, %v1452
        %v1454 = vshll.u32 %v1414, 8
        %v1455 = vmul.u32.u64.compose %v1454, %v1453
        %v1456 = vextract.low.u32 %v1455
        %v1457 = vextract.high.u32 %v1455
        %v1458 = vmul.u32.u64.compose %v1454, %v1449
        %v1459 = vextract.low.u32 %v1458
        %v1460 = vextract.high.u32 %v1458
        %v1461 = vmul.u32 %v1454, %v1445
        %v1462 = vadd.s32 %v1457, %v1459
        %vm1463 = vc.u32 %v1457, %v1459
        %v1464 = vadd.s32 %v1460, 1
        %v1465 = vsel %vm1463, %v1464, %v1460
        %v1466 = vadd.s32 %v1461, %v1465
        %v1467 = vadd.s32 %v1466, 536870912
        %v1468 = vshrl.u32 %v1467, 30
        %v1469 = vshll.u32 %v1468, 30
        %v1470 = vsub.s32 %v1466, %v1469
        %vm1471 = vcmp.lt.s32.totalorder %v1470, 0
        %v1472 = vsub.s32 0, %v1470
        %v1473 = vsel %vm1471, %v1472, %v1470
        %v1474 = vclz %v1473
        %v1475 = vsub.s32 %v1474, 2
        %vm1476 = vcmp.gt.s32.totalorder 0, %v1475
        %v1477 = vsel %vm1476, 0, %v1475
        %v1478 = vsub.s32 32, %v1477
        %v1479 = vshll.u32 %v1470, %v1477
        %v1480 = vshrl.u32 %v1462, %v1478
        %v1481 = vor.u32 %v1479, %v1480
        %v1482 = vsub.s32 4294967266, %v1477
        %v1483 = vadd.s32 %v1482, 127
        %v1484 = vshll.u32 %v1483, 23
        %v1485 = vor.u32 4788187, %v1484
        %v1486 = vand.u32 2147483647, %v1485
        %v1488 = vcvt.s32.f32 %v1481
        %v1489 = vmul.f32 %v1488, %v1486
        %v1490 = vxor.u32 %v1489, 2147483648
        %v1491 = vsel %vm1408, %v1490, %v1489
        %v1492 = vsub.s32 4, %v1468
        %v1493 = vsel %vm1408, %v1492, %v1468
        %v1494 = vsel %vm1407, %v1093, %v1491
        %v1495 = vsel %vm1407, 0, %v1493
        %v1496 = vcosq.f32.pop %v1494
        %v1497 = vsinq.f32.pop %v1494
        %vm1498 = vweird.f32 %v1093
        %v1499 = vadd.s32 %v1495, 3
        %v1500 = vand.u32 %v1499, 3
        %vm1501 = vcmp.lt.s32.totalorder %v1500, 2
        %vm1502 = vcmp.eq.s32.totalorder %v1500, 0
        %v1503 = vxor.u32 %v1497, 2147483648
        %v1504 = vsel %vm1502, %v1496, %v1503
        %vm1505 = vcmp.eq.s32.totalorder %v1500, 2
        %v1506 = vxor.u32 %v1496, 2147483648
        %v1507 = vsel %vm1505, %v1506, %v1497
        %v1508 = vsel %vm1501, %v1504, %v1507
        %v1509 = vsel %vm1498, nan, %v1508
        %v1510 = vmul.f32 %v777, %v777
        %v1511 = vmul.f32 %v881, %v881
        %v1512 = vmul.f32 %v985, %v985
        %v1513 = vmul.f32 %v1089, %v1089
        %1515 = vset.pattern.permute.xlu0 0
        %1516 = vperm.xlu0 %1515, %v416
        %v1517 = vpop.permute.xlu0 %1516
        %1520 = vset.pattern.permute.xlu0 0
        %1521 = vperm.xlu0 %1520, %v418
        %v1522 = vpop.permute.xlu0 %1521
        %v1524 = vmul.f32 %v1517, %v1510
        %v1525 = vmul.f32 %v1517, %v1511
        %v1526 = vmul.f32 %v1522, %v1512
        %v1527 = vmul.f32 %v1522, %v1513
        %v1528 = vadd.f32 %v652, %v1524
        %v1529 = vadd.f32 %v653, %v1525
        %v1530 = vadd.f32 %v654, %v1526
        %v1531 = vadd.f32 %v655, %v1527
        %v1532 = vmul.f32 %v1197, %v1197
        %v1533 = vmul.f32 %v1301, %v1301
        %v1534 = vmul.f32 %v1405, %v1405
        %v1535 = vmul.f32 %v1509, %v1509
        %v1536 = vmul.f32 %v1517, %v1532
        %v1537 = vmul.f32 %v1517, %v1533
        %v1538 = vmul.f32 %v1522, %v1534
        %v1539 = vmul.f32 %v1522, %v1535
        %v1540 = vadd.f32 %v656, %v1536
        %v1541 = vadd.f32 %v657, %v1537
        %v1542 = vadd.f32 %v658, %v1538
        %v1543 = vadd.f32 %v659, %v1539
        %s1544 = ssub.s32 %s391, 4
        %v1545 = vlaneseq
        %v1546 = vand.u32 %v1545, 127
        %v1547 = vadd.s32 %v1546, 128
        %v1548 = vstv %s1544
        %v1549 = vadd.s32 %v1548, %v1546
        %v1550 = vadd.s32 %v1548, %v1547
        %vm1551 = vcmp.lt.s32.totalorder %v1549, 0
        %vm1552 = vcmp.lt.s32.totalorder %v1550, 0
        %vm1553 = vcmp.ge.s32.totalorder %v1549, 256
        %vm1554 = vcmp.ge.s32.totalorder %v1550, 256
        %v1555 = vsel %vm1553, 1, 0
        %v1556 = vsel %vm1554, 1, 0
        %vm1557 = vcmp.eq.s32.totalorder %v1555, 1
        %vm1558 = vcmp.eq.s32.totalorder %v1556, 1
        %1560 = vset.pattern.permute.xlu0 9
        %1561 = vperm.xlu0 %1560, %v1541
        %v1562 = vpop.permute.xlu0 %1561
        %1565 = vset.pattern.permute.xlu0 9
        %1566 = vperm.xlu0 %1565, %v1543
        %v1567 = vpop.permute.xlu0 %1566
        %1573 = vrot.lane.b32.xlu0 %v1528, 123
        %v1574 = vpop.permute.xlu0 %1573
        %1575 = vrot.lane.b32.xlu0 %v1529, 123
        %v1576 = vpop.permute.xlu0 %1575
        %1577 = vrot.lane.b32.xlu0 %v1530, 123
        %v1578 = vpop.permute.xlu0 %1577
        %1579 = vrot.lane.b32.xlu0 %v1531, 123
        %v1580 = vpop.permute.xlu0 %1579
        %vm1581 = vcmask 1006592
        %v1582 = vsel %vm1581, %v1574, %v1576
        %v1583 = vsel %vm1581, %v1578, %v1580
        %v1588 = vsel %vm1557, %v1562, %v1582
        %v1589 = vsel %vm1558, %v1562, %v1576
        %v1590 = vsel %vm1557, %v1567, %v1583
        %v1591 = vsel %vm1558, %v1567, %v1580
        %v1592 = vsel %vm1551, 1, 0
        %v1593 = vsel %vm1552, 1, 0
        %vm1594 = vcmp.eq.s32.totalorder %v1592, 1
        %vm1595 = vcmp.eq.s32.totalorder %v1593, 1
        %1596 = vset.pattern.permute.xlu0 9
        %1597 = vperm.xlu0 %1596, %v1528
        %v1598 = vpop.permute.xlu0 %1597
        %1600 = vset.pattern.permute.xlu0 9
        %1601 = vperm.xlu0 %1600, %v1530
        %v1602 = vpop.permute.xlu0 %1601
        %v1604 = vsel %vm1594, %v1598, %v1588
        %v1605 = vsel %vm1595, %v1598, %v1589
        %v1606 = vsel %vm1594, %v1602, %v1590
        %v1607 = vsel %vm1595, %v1602, %v1591
        %1610 = vrot.lane.b32.xlu0 %v1540, 122
        %v1611 = vpop.permute.xlu0 %1610
        %1612 = vrot.lane.b32.xlu0 %v1541, 122
        %v1613 = vpop.permute.xlu0 %1612
        %1614 = vrot.lane.b32.xlu0 %v1542, 122
        %v1615 = vpop.permute.xlu0 %1614
        %1616 = vrot.lane.b32.xlu0 %v1543, 122
        %v1617 = vpop.permute.xlu0 %1616
        %vm1618 = vcmask 998400
        %v1619 = vsel %vm1618, %v1611, %v1613
        %v1620 = vsel %vm1618, %v1615, %v1617
        %v1625 = vsel %vm1557, %v1562, %v1619
        %v1626 = vsel %vm1558, %v1562, %v1613
        %v1627 = vsel %vm1557, %v1567, %v1620
        %v1628 = vsel %vm1558, %v1567, %v1617
        %v1629 = vsel %vm1594, %v1598, %v1625
        %v1630 = vsel %vm1595, %v1598, %v1626
        %v1631 = vsel %vm1594, %v1602, %v1627
        %v1632 = vsel %vm1595, %v1602, %v1628
        %v1633 = vmul.f32 %v1604, 0.009389464
        %v1634 = vmul.f32 %v1605, 0.009389464
        %v1635 = vmul.f32 %v1606, 0.009389464
        %v1636 = vmul.f32 %v1607, 0.009389464
        %v1637 = vmul.f32 %v1629, 0.0020289666
        %v1638 = vmul.f32 %v1630, 0.0020289666
        %v1639 = vmul.f32 %v1631, 0.0020289666
        %v1640 = vmul.f32 %v1632, 0.0020289666
        %1645 = vrot.lane.b32.xlu0 %v1637, 1
        %v1646 = vpop.permute.xlu0 %1645
        %1647 = vrot.lane.b32.xlu0 %v1638, 1
        %v1648 = vpop.permute.xlu0 %1647
        %1649 = vrot.lane.b32.xlu0 %v1639, 1
        %v1650 = vpop.permute.xlu0 %1649
        %1651 = vrot.lane.b32.xlu0 %v1640, 1
        %v1652 = vpop.permute.xlu0 %1651
        %v1653 = vsel %vm443, %v1646, %v1648
        %v1654 = vsel %vm443, %v1650, %v1652
        %v1659 = vadd.f32 %v1633, %v1646
        %v1660 = vadd.f32 %v1634, %v1653
        %v1661 = vadd.f32 %v1635, %v1650
        %v1662 = vadd.f32 %v1636, %v1654
        %v1663 = vmul.f32 %v1604, -0.057657376
        %v1664 = vmul.f32 %v1605, -0.057657376
        %v1665 = vmul.f32 %v1606, -0.057657376
        %v1666 = vmul.f32 %v1607, -0.057657376
        %1671 = vrot.lane.b32.xlu0 %v1663, 127
        %v1672 = vpop.permute.xlu0 %1671
        %1673 = vrot.lane.b32.xlu0 %v1664, 127
        %v1674 = vpop.permute.xlu0 %1673
        %1675 = vrot.lane.b32.xlu0 %v1665, 127
        %v1676 = vpop.permute.xlu0 %1675
        %1677 = vrot.lane.b32.xlu0 %v1666, 127
        %v1678 = vpop.permute.xlu0 %1677
        %vm1679 = vcmask 1039360
        %v1680 = vsel %vm1679, %v1672, %v1674
        %v1681 = vsel %vm1679, %v1676, %v1678
        %v1686 = vadd.f32 %v1659, %v1680
        %v1687 = vadd.f32 %v1660, %v1674
        %v1688 = vadd.f32 %v1661, %v1681
        %v1689 = vadd.f32 %v1662, %v1678
        %v1690 = vmul.f32 %v1629, -0.025543464
        %v1691 = vmul.f32 %v1630, -0.025543464
        %v1692 = vmul.f32 %v1631, -0.025543464
        %v1693 = vmul.f32 %v1632, -0.025543464
        %v1694 = vadd.f32 %v1686, %v1690
        %v1695 = vadd.f32 %v1687, %v1691
        %v1696 = vadd.f32 %v1688, %v1692
        %v1697 = vadd.f32 %v1689, %v1693
        %v1698 = vmul.f32 %v1604, 0.4432098
        %v1699 = vmul.f32 %v1605, 0.4432098
        %v1700 = vmul.f32 %v1606, 0.4432098
        %v1701 = vmul.f32 %v1607, 0.4432098
        %1706 = vrot.lane.b32.xlu0 %v1698, 126
        %v1707 = vpop.permute.xlu0 %1706
        %1708 = vrot.lane.b32.xlu0 %v1699, 126
        %v1709 = vpop.permute.xlu0 %1708
        %1710 = vrot.lane.b32.xlu0 %v1700, 126
        %v1711 = vpop.permute.xlu0 %1710
        %1712 = vrot.lane.b32.xlu0 %v1701, 126
        %v1713 = vpop.permute.xlu0 %1712
        %vm1714 = vcmask 1031168
        %v1715 = vsel %vm1714, %v1707, %v1709
        %v1716 = vsel %vm1714, %v1711, %v1713
        %v1721 = vadd.f32 %v1694, %v1715
        %v1722 = vadd.f32 %v1695, %v1709
        %v1723 = vadd.f32 %v1696, %v1716
        %v1724 = vadd.f32 %v1697, %v1713
        %v1725 = vmul.f32 %v1629, 0.12857261
        %v1726 = vmul.f32 %v1630, 0.12857261
        %v1727 = vmul.f32 %v1631, 0.12857261
        %v1728 = vmul.f32 %v1632, 0.12857261
        %1733 = vrot.lane.b32.xlu0 %v1725, 127
        %v1734 = vpop.permute.xlu0 %1733
        %1735 = vrot.lane.b32.xlu0 %v1726, 127
        %v1736 = vpop.permute.xlu0 %1735
        %1737 = vrot.lane.b32.xlu0 %v1727, 127
        %v1738 = vpop.permute.xlu0 %1737
        %1739 = vrot.lane.b32.xlu0 %v1728, 127
        %v1740 = vpop.permute.xlu0 %1739
        %v1741 = vsel %vm1679, %v1734, %v1736
        %v1742 = vsel %vm1679, %v1738, %v1740
        %v1747 = vadd.f32 %v1721, %v1741
        %v1748 = vadd.f32 %v1722, %v1736
        %v1749 = vadd.f32 %v1723, %v1742
        %v1750 = vadd.f32 %v1724, %v1740
        %v1751 = vmul.f32 %v1604, 0.12857261
        %v1752 = vmul.f32 %v1605, 0.12857261
        %v1753 = vmul.f32 %v1606, 0.12857261
        %v1754 = vmul.f32 %v1607, 0.12857261
        %1759 = vrot.lane.b32.xlu0 %v1751, 125
        %v1760 = vpop.permute.xlu0 %1759
        %1761 = vrot.lane.b32.xlu0 %v1752, 125
        %v1762 = vpop.permute.xlu0 %1761
        %1763 = vrot.lane.b32.xlu0 %v1753, 125
        %v1764 = vpop.permute.xlu0 %1763
        %1765 = vrot.lane.b32.xlu0 %v1754, 125
        %v1766 = vpop.permute.xlu0 %1765
        %vm1767 = vcmask 1022976
        %v1768 = vsel %vm1767, %v1760, %v1762
        %v1769 = vsel %vm1767, %v1764, %v1766
        %v1774 = vadd.f32 %v1747, %v1768
        %v1775 = vadd.f32 %v1748, %v1762
        %v1776 = vadd.f32 %v1749, %v1769
        %v1777 = vadd.f32 %v1750, %v1766
        %v1778 = vmul.f32 %v1629, 0.4432098
        %v1779 = vmul.f32 %v1630, 0.4432098
        %v1780 = vmul.f32 %v1631, 0.4432098
        %v1781 = vmul.f32 %v1632, 0.4432098
        %1786 = vrot.lane.b32.xlu0 %v1778, 126
        %v1787 = vpop.permute.xlu0 %1786
        %1788 = vrot.lane.b32.xlu0 %v1779, 126
        %v1789 = vpop.permute.xlu0 %1788
        %1790 = vrot.lane.b32.xlu0 %v1780, 126
        %v1791 = vpop.permute.xlu0 %1790
        %1792 = vrot.lane.b32.xlu0 %v1781, 126
        %v1793 = vpop.permute.xlu0 %1792
        %v1794 = vsel %vm1714, %v1787, %v1789
        %v1795 = vsel %vm1714, %v1791, %v1793
        %v1800 = vadd.f32 %v1774, %v1794
        %v1801 = vadd.f32 %v1775, %v1789
        %v1802 = vadd.f32 %v1776, %v1795
        %v1803 = vadd.f32 %v1777, %v1793
        %v1804 = vmul.f32 %v1604, -0.025543464
        %v1805 = vmul.f32 %v1605, -0.025543464
        %v1806 = vmul.f32 %v1606, -0.025543464
        %v1807 = vmul.f32 %v1607, -0.025543464
        %1812 = vrot.lane.b32.xlu0 %v1804, 124
        %v1813 = vpop.permute.xlu0 %1812
        %1814 = vrot.lane.b32.xlu0 %v1805, 124
        %v1815 = vpop.permute.xlu0 %1814
        %1816 = vrot.lane.b32.xlu0 %v1806, 124
        %v1817 = vpop.permute.xlu0 %1816
        %1818 = vrot.lane.b32.xlu0 %v1807, 124
        %v1819 = vpop.permute.xlu0 %1818
        %vm1820 = vcmask 1014784
        %v1821 = vsel %vm1820, %v1813, %v1815
        %v1822 = vsel %vm1820, %v1817, %v1819
        %v1827 = vadd.f32 %v1800, %v1821
        %v1828 = vadd.f32 %v1801, %v1815
        %v1829 = vadd.f32 %v1802, %v1822
        %v1830 = vadd.f32 %v1803, %v1819
        %v1831 = vmul.f32 %v1629, -0.057657376
        %v1832 = vmul.f32 %v1630, -0.057657376
        %v1833 = vmul.f32 %v1631, -0.057657376
        %v1834 = vmul.f32 %v1632, -0.057657376
        %1839 = vrot.lane.b32.xlu0 %v1831, 125
        %v1840 = vpop.permute.xlu0 %1839
        %1841 = vrot.lane.b32.xlu0 %v1832, 125
        %v1842 = vpop.permute.xlu0 %1841
        %1843 = vrot.lane.b32.xlu0 %v1833, 125
        %v1844 = vpop.permute.xlu0 %1843
        %1845 = vrot.lane.b32.xlu0 %v1834, 125
        %v1846 = vpop.permute.xlu0 %1845
        %v1847 = vsel %vm1767, %v1840, %v1842
        %v1848 = vsel %vm1767, %v1844, %v1846
        %v1853 = vadd.f32 %v1827, %v1847
        %v1854 = vadd.f32 %v1828, %v1842
        %v1855 = vadd.f32 %v1829, %v1848
        %v1856 = vadd.f32 %v1830, %v1846
        %v1857 = vmul.f32 %v1604, 0.0020289666
        %v1858 = vmul.f32 %v1605, 0.0020289666
        %v1859 = vmul.f32 %v1606, 0.0020289666
        %v1860 = vmul.f32 %v1607, 0.0020289666
        %1865 = vrot.lane.b32.xlu0 %v1857, 123
        %v1866 = vpop.permute.xlu0 %1865
        %1867 = vrot.lane.b32.xlu0 %v1858, 123
        %v1868 = vpop.permute.xlu0 %1867
        %1869 = vrot.lane.b32.xlu0 %v1859, 123
        %v1870 = vpop.permute.xlu0 %1869
        %1871 = vrot.lane.b32.xlu0 %v1860, 123
        %v1872 = vpop.permute.xlu0 %1871
        %v1873 = vsel %vm1581, %v1866, %v1868
        %v1874 = vsel %vm1581, %v1870, %v1872
        %v1879 = vadd.f32 %v1853, %v1873
        %v1880 = vadd.f32 %v1854, %v1868
        %v1881 = vadd.f32 %v1855, %v1874
        %v1882 = vadd.f32 %v1856, %v1872
        %v1883 = vmul.f32 %v1629, 0.009389464
        %v1884 = vmul.f32 %v1630, 0.009389464
        %v1885 = vmul.f32 %v1631, 0.009389464
        %v1886 = vmul.f32 %v1632, 0.009389464
        %1891 = vrot.lane.b32.xlu0 %v1883, 124
        %v1892 = vpop.permute.xlu0 %1891
        %1893 = vrot.lane.b32.xlu0 %v1884, 124
        %v1894 = vpop.permute.xlu0 %1893
        %1895 = vrot.lane.b32.xlu0 %v1885, 124
        %v1896 = vpop.permute.xlu0 %1895
        %1897 = vrot.lane.b32.xlu0 %v1886, 124
        %v1898 = vpop.permute.xlu0 %1897
        %v1899 = vsel %vm1820, %v1892, %v1894
        %v1900 = vsel %vm1820, %v1896, %v1898
        %v1905 = vadd.f32 %v1879, %v1899
        %v1906 = vadd.f32 %v1880, %v1894
        %v1907 = vadd.f32 %v1881, %v1900
        %v1908 = vadd.f32 %v1882, %v1898
        %s1909 = ssub.s32 %s391, 1
        %v1910 = vstv %s1909
        %v1911 = vadd.s32 %v1910, %v1546
        %v1912 = vadd.s32 %v1910, %v1547
        %vm1913 = vcmp.ge.s32.totalorder %v1911, 0
        %vm1914 = vcmp.ge.s32.totalorder %v1912, 0
        %vm1915 = vcmp.lt.s32.totalorder %v1911, 256
        %vm1916 = vcmp.lt.s32.totalorder %v1912, 256
        %vm1917 = vmand %vm1913, %vm1915
        %vm1918 = vmand %vm1914, %vm1916
        %v1919 = vsel %vm1917, 1, 0
        %v1920 = vsel %vm1918, 1, 0
        %vm1921 = vcmp.eq.s32.totalorder %v1919, 1
        %vm1922 = vcmp.eq.s32.totalorder %v1920, 1
        %1927 = vrot.lane.b32.xlu0 %v1905, 127
        %v1928 = vpop.permute.xlu0 %1927
        %1929 = vrot.lane.b32.xlu0 %v1906, 127
        %v1930 = vpop.permute.xlu0 %1929
        %1931 = vrot.lane.b32.xlu0 %v1907, 127
        %v1932 = vpop.permute.xlu0 %1931
        %1933 = vrot.lane.b32.xlu0 %v1908, 127
        %v1934 = vpop.permute.xlu0 %1933
        %v1935 = vsel %vm1679, %v1928, %v1930
        %v1936 = vsel %vm1679, %v1932, %v1934
        %v1941 = vsel %vm1921, %v1935, 0.0
        %v1942 = vsel %vm1922, %v1930, 0.0
        %v1943 = vsel %vm1921, %v1936, 0.0
        %v1944 = vsel %vm1922, %v1934, 0.0
        %v1945 = vpack.c.bf16 %v1943, %v1941
        %v1946 = vpack.c.bf16 %v1944, %v1942
        %v1947 = vld [vmem:[%s4] sm:$0xf]
        %v1948 = vld [vmem:[%s4 + $0x4] sm:$0xf]
        %s1949 = scalar_lea.vmem %s4, 8
        %v1950 = vld [vmem:[%s1949] sm:$0xf]
        %v1951 = vld [vmem:[%s1949 + $0x4] sm:$0xf]
        %v1954 = vunpack.c.l.b16 %v1950
        %v1955 = vunpack.c.l.b16 %v1951
        %v1956 = vpack.c.b16 %v1955, %v1954
        %1959 = vrot.lane.b32.xlu0 %v1945, 127
        %v1960 = vpop.permute.xlu0 %1959
        %1961 = vrot.lane.b32.xlu0 %v1946, 127
        %v1962 = vpop.permute.xlu0 %1961
        %vm1963 = vcmask 1039360
        %v1964 = vsel %vm1963, %v1960, %v1962
        %vm1966 = vcmask 130048
        %v1968 = vsel %vm1966, %v1956, 0
        %1970 = vmatprep.subr.bf16.mxu0 0
        %1971 = vmatpush1.bf16.msra.mxu0 %v1964
        %1972 = vmatprep.subr.bf16.mxu0 0
        %1973 = vmatpush1.bf16.msra.mxu0 0
        %1974 = vmatprep.subr.bf16.mxu0 0
        %1975 = vmatpush1.bf16.msra.mxu0 0
        %1976 = vmatprep.subr.bf16.mxu0 0
        %1977 = vmatpush1.bf16.msra.mxu0 0
        %1978 = vmatprep.subr.bf16.mxu0 0
        %1979 = vmatpush1.bf16.msra.mxu0 0
        %1980 = vmatprep.subr.bf16.mxu0 0
        %1981 = vmatpush1.bf16.msra.mxu0 0
        %1982 = vmatprep.subr.bf16.mxu0 0
        %1983 = vmatpush1.bf16.msra.mxu0 0
        %1984 = vmatprep.subr.bf16.mxu0 0
        %1985 = vmatpush1.bf16.msra.mxu0 0
        %1986 = vmatprep.subr.bf16.mxu0 0
        %1987 = vmatpush1.bf16.msra.mxu0 0
        %1988 = vmatprep.subr.bf16.mxu0 0
        %1989 = vmatpush1.bf16.msra.mxu0 0
        %1990 = vmatprep.subr.bf16.mxu0 0
        %1991 = vmatpush1.bf16.msra.mxu0 0
        %1992 = vmatprep.subr.bf16.mxu0 0
        %1993 = vmatpush1.bf16.msra.mxu0 0
        %1994 = vmatprep.subr.bf16.mxu0 0
        %1995 = vmatpush1.bf16.msra.mxu0 0
        %1996 = vmatprep.subr.bf16.mxu0 0
        %1997 = vmatpush1.bf16.msra.mxu0 0
        %1998 = vmatprep.subr.bf16.mxu0 0
        %1999 = vmatpush1.bf16.msra.mxu0 0
        %2000 = vmatprep.subr.bf16.mxu0 0
        %2001 = vmatpush1.bf16.msra.mxu0 0
        %2002 = vmatprep.mubr.bf16.mxu0 0
        %2003 = vmatmul.mubr.bf16.gmra.mrb[0].mxu0 %v1968
        %v2004 = vpop.f32.mrb[0].mxu0
        %v2005 = vadd.f32 0.0, %v2004
        %v2006 = vpop.f32.mrb[0].mxu0
        %v2007 = vpop.f32.mrb[0].mxu0
        %v2008 = vadd.f32 0.0, %v2007
        %v2009 = vpop.f32.mrb[0].mxu0
        %2010 = vdwg.mxu0
        %v2013 = vunpack.c.l.b16 %v1947
        %v2014 = vunpack.c.l.b16 %v1948
        %v2015 = vpack.c.b16 %v2014, %v2013
        %v2017 = vsel %vm1966, %v2015, 0
        %2019 = vmatprep.subr.bf16.mxu0 0
        %2020 = vmatpush1.bf16.msra.mxu0 %v1945
        %2021 = vmatprep.subr.bf16.mxu0 0
        %2022 = vmatpush1.bf16.msra.mxu0 0
        %2023 = vmatprep.subr.bf16.mxu0 0
        %2024 = vmatpush1.bf16.msra.mxu0 0
        %2025 = vmatprep.subr.bf16.mxu0 0
        %2026 = vmatpush1.bf16.msra.mxu0 0
        %2027 = vmatprep.subr.bf16.mxu0 0
        %2028 = vmatpush1.bf16.msra.mxu0 0
        %2029 = vmatprep.subr.bf16.mxu0 0
        %2030 = vmatpush1.bf16.msra.mxu0 0
        %2031 = vmatprep.subr.bf16.mxu0 0
        %2032 = vmatpush1.bf16.msra.mxu0 0
        %2033 = vmatprep.subr.bf16.mxu0 0
        %2034 = vmatpush1.bf16.msra.mxu0 0
        %2035 = vmatprep.subr.bf16.mxu0 0
        %2036 = vmatpush1.bf16.msra.mxu0 0
        %2037 = vmatprep.subr.bf16.mxu0 0
        %2038 = vmatpush1.bf16.msra.mxu0 0
        %2039 = vmatprep.subr.bf16.mxu0 0
        %2040 = vmatpush1.bf16.msra.mxu0 0
        %2041 = vmatprep.subr.bf16.mxu0 0
        %2042 = vmatpush1.bf16.msra.mxu0 0
        %2043 = vmatprep.subr.bf16.mxu0 0
        %2044 = vmatpush1.bf16.msra.mxu0 0
        %2045 = vmatprep.subr.bf16.mxu0 0
        %2046 = vmatpush1.bf16.msra.mxu0 0
        %2047 = vmatprep.subr.bf16.mxu0 0
        %2048 = vmatpush1.bf16.msra.mxu0 0
        %2049 = vmatprep.subr.bf16.mxu0 0
        %2050 = vmatpush1.bf16.msra.mxu0 0
        %2051 = vmatprep.mubr.bf16.mxu0 0
        %2052 = vmatmul.mubr.bf16.gmra.mrb[0].mxu0 %v2017
        %v2053 = vpop.f32.mrb[0].mxu0
        %v2054 = vadd.f32 %v2005, %v2053
        %v2055 = vpop.f32.mrb[0].mxu0
        %v2056 = vpop.f32.mrb[0].mxu0
        %v2057 = vadd.f32 %v2008, %v2056
        %v2058 = vpop.f32.mrb[0].mxu0
        %2059 = vdwg.mxu0
        %s2060 = scalar_lea.vmem %s4, 16
        %v2061 = vld [vmem:[%s2060] sm:$0xf]
        %v2062 = vld [vmem:[%s2060 + $0x4] sm:$0xf]
        %v2065 = vunpack.c.l.b16 %v2061
        %v2066 = vunpack.c.l.b16 %v2062
        %v2067 = vpack.c.b16 %v2066, %v2065
        %2068 = vrot.lane.b32.xlu0 %v1945, 126
        %v2069 = vpop.permute.xlu0 %2068
        %2070 = vrot.lane.b32.xlu0 %v1946, 126
        %v2071 = vpop.permute.xlu0 %2070
        %vm2072 = vcmask 1031168
        %v2073 = vsel %vm2072, %v2069, %v2071
        %v2076 = vsel %vm1966, %v2067, 0
        %2078 = vmatprep.subr.bf16.mxu0 0
        %2079 = vmatpush1.bf16.msra.mxu0 %v2073
        %2080 = vmatprep.subr.bf16.mxu0 0
        %2081 = vmatpush1.bf16.msra.mxu0 0
        %2082 = vmatprep.subr.bf16.mxu0 0
        %2083 = vmatpush1.bf16.msra.mxu0 0
        %2084 = vmatprep.subr.bf16.mxu0 0
        %2085 = vmatpush1.bf16.msra.mxu0 0
        %2086 = vmatprep.subr.bf16.mxu0 0
        %2087 = vmatpush1.bf16.msra.mxu0 0
        %2088 = vmatprep.subr.bf16.mxu0 0
        %2089 = vmatpush1.bf16.msra.mxu0 0
        %2090 = vmatprep.subr.bf16.mxu0 0
        %2091 = vmatpush1.bf16.msra.mxu0 0
        %2092 = vmatprep.subr.bf16.mxu0 0
        %2093 = vmatpush1.bf16.msra.mxu0 0
        %2094 = vmatprep.subr.bf16.mxu0 0
        %2095 = vmatpush1.bf16.msra.mxu0 0
        %2096 = vmatprep.subr.bf16.mxu0 0
        %2097 = vmatpush1.bf16.msra.mxu0 0
        %2098 = vmatprep.subr.bf16.mxu0 0
        %2099 = vmatpush1.bf16.msra.mxu0 0
        %2100 = vmatprep.subr.bf16.mxu0 0
        %2101 = vmatpush1.bf16.msra.mxu0 0
        %2102 = vmatprep.subr.bf16.mxu0 0
        %2103 = vmatpush1.bf16.msra.mxu0 0
        %2104 = vmatprep.subr.bf16.mxu0 0
        %2105 = vmatpush1.bf16.msra.mxu0 0
        %2106 = vmatprep.subr.bf16.mxu0 0
        %2107 = vmatpush1.bf16.msra.mxu0 0
        %2108 = vmatprep.subr.bf16.mxu0 0
        %2109 = vmatpush1.bf16.msra.mxu0 0
        %2110 = vmatprep.mubr.bf16.mxu0 0
        %2111 = vmatmul.mubr.bf16.gmra.mrb[0].mxu0 %v2076
        %v2112 = vpop.f32.mrb[0].mxu0
        %v2113 = vadd.f32 0.0, %v2112
        %v2114 = vpop.f32.mrb[0].mxu0
        %v2115 = vpop.f32.mrb[0].mxu0
        %v2116 = vadd.f32 0.0, %v2115
        %v2117 = vpop.f32.mrb[0].mxu0
        %2118 = vdwg.mxu0
        %v2119 = vadd.f32 %v2054, %v2113
        %v2120 = vadd.f32 %v2057, %v2116
        %v2121 = vld [vmem:[%s5] sm:$0xff]
        %v2122 = vld [vmem:[%s5 + $0x8] sm:$0xff]
        %2124 = vset.pattern.permute.xlu0 0
        %2125 = vperm.xlu0 %2124, %v2121
        %v2126 = vpop.permute.xlu0 %2125
        %2129 = vset.pattern.permute.xlu0 0
        %2130 = vperm.xlu0 %2129, %v2122
        %v2131 = vpop.permute.xlu0 %2130
        %v2133 = vadd.f32 %v2119, %v2126
        %v2134 = vadd.f32 %v2120, %v2131
        %v2135 = vpack.c.bf16 %v2134, %v2133
        %v2137 = vunpack.c.l.b16 %v2135
        %v2138 = vunpack.c.h.b16 %v2135
        %v2139 = vpack.c.b16 %v2137, %v2137
        %v2140 = vpack.c.b16 %v2138, %v2138
        %2143 = vst [vmem:[%s360] sm:$0xf] %v2139
        %2144 = vst [vmem:[%s360 + $0x4] sm:$0xf] %v2140
        %2145 = vrot.lane.b32.xlu0 %v2135, 14
        %v2146 = vpop.permute.xlu0 %2145
        %v2149 = vsel %vm404, %v2135, %v2146
        %v2151 = vunpack.c.l.b16 %v2149
        %v2152 = vunpack.c.h.b16 %v2149
        %v2153 = vpack.c.b16 %v2151, %v2151
        %v2154 = vpack.c.b16 %v2152, %v2152
        %vm2157 = vcmask 109568
        %2158 = vst.msk [vmem:[%s389] sm:$0xf] %vm2157, %v2153
        %2159 = vst.msk [vmem:[%s389 + $0x4] sm:$0xf] %vm2157, %v2154
        %s2160 = sand.u32 %s184, 1
        %s2161 = scalar_lea.sflag [#allocation4], %s2160
        %s2162 = sand.u32 %s184, 1
        %s2163 = smul.addr %s2162, 8
        %s2164 = scalar_lea.vmem [#allocation3], %s2163
        %p2165 = scmp.lt.s32.totalorder %s27, 1
        %s2166 = scalar_select %p2165, %s27, 1
        %p2167 = scmp.lt.s32.totalorder %s26, 1
        %s2168 = scalar_select %p2167, %s26, 1
        %s2169 = smul.addr %s2168, 2
        %s2170 = smul.addr %s2166, 4
        %s2171 = sadd.s32 %s2169, %s2170
        %s2172 = smul.addr %s2171, 4
        %s2173 = scalar_lea.vmem %s7, %s2172
        // Predicated region
        $region83: #{tpu_custom_call.1} parent=77 // pred_check
          %p2174 = pneg %p194
        $region84: #{tpu_custom_call.1} parent=77 // pred_check_branch
          %2176 = sbr.rel (%p2174) target = $region86
        $region85: #{tpu_custom_call.1} parent=77 // pred_region
          %s2178 = ssub.s32 128, 128
          %2179 = vsyncadd %s2161, %s2178
          %s2180 = smul.addr %s27, 4
          %s2181 = sadd.s32 %s26, %s2180
          %s2182 = smul.addr %s2181, 64
          %s2183 = scalar_lea.hbm %s6, %s2182
          %s2184 = sshll.u32 %s2164, 4
          %s2185 = int_to_ptr.vmem [resolvable:$true] %s2184
          %2190 = dma.vmem_to_hbm [thread:$0]  %s2185, 128, %s2183, %s2161, 64, 128, 4
        $region86: #{tpu_custom_call.1} parent=77 // pred_fallthru
          _
        // Predicated region
        $region87: #{tpu_custom_call.1} parent=77 // pred_check
          %p2191 = pneg %p222
        $region88: #{tpu_custom_call.1} parent=77 // pred_check_branch
          %2193 = sbr.rel (%p2191) target = $region90
        $region89: #{tpu_custom_call.1} parent=77 // pred_region
          _
        $region90: #{tpu_custom_call.1} parent=77 // pred_fallthru
          _
      $region78: #{tpu_custom_call.1} parent=5 // pred_fallthru
        _
      %p2194 = scmp.le.s32.totalorder 2, %s17
      // Predicated region
      $region91: #{tpu_custom_call.1} parent=5 // pred_check
        %p2195 = pneg %p2194
      $region92: #{tpu_custom_call.1} parent=5 // pred_check_branch
        %2197 = sbr.rel (%p2195) target = $region94
      $region93: #{tpu_custom_call.1} parent=5 // pred_region
        %s2198 = ssub.s32 %s17, 2
        // Predicated region
        $region95: #{tpu_custom_call.1} parent=93 // pred_check
          %p2199 = pneg %p200
        $region96: #{tpu_custom_call.1} parent=93 // pred_check_branch
          %2201 = sbr.rel (%p2199) target = $region98
        $region97: #{tpu_custom_call.1} parent=93 // pred_region
          %s2202 = sand.u32 %s185, 1
          %s2203 = scalar_lea.sflag [#allocation4], %s2202
          %s2204 = sand.u32 %s185, 1
          %s2205 = smul.addr %s2204, 8
          %s2206 = scalar_lea.vmem [#allocation3], %s2205
          %2207 = dma.done %s2203, 128
        $region98: #{tpu_custom_call.1} parent=93 // pred_fallthru
          _
        // Predicated region
        $region99: #{tpu_custom_call.1} parent=93 // pred_check
          %p2208 = pneg %p228
        $region100: #{tpu_custom_call.1} parent=93 // pred_check_branch
          %2210 = sbr.rel (%p2208) target = $region102
        $region101: #{tpu_custom_call.1} parent=93 // pred_region
          %p2211 = scmp.lt.s32.totalorder %s29, 1
          %s2212 = scalar_select %p2211, %s29, 1
          %p2213 = scmp.lt.s32.totalorder %s28, 1
          %s2214 = scalar_select %p2213, %s28, 1
          %s2215 = smul.addr %s2214, 2
          %s2216 = smul.addr %s2212, 4
          %s2217 = sadd.s32 %s2215, %s2216
          %s2218 = smul.addr %s2217, 4
          %s2219 = scalar_lea.vmem %s7, %s2218
        $region102: #{tpu_custom_call.1} parent=93 // pred_fallthru
          _
      $region94: #{tpu_custom_call.1} parent=5 // pred_fallthru
        _
    $region6: #{tpu_custom_call.1} parent=1 // loop_footer
      %s21 = sadd.s32 1, %s17
    $region7: #{tpu_custom_call.1} parent=1 // loop_footer_branch
      %16 = sbr.rel target = $region3
    $region8: #{tpu_custom_call.1} parent=1 // loop_exit
      _
    %2220 = vsyncpa [#allocation4], 1
    %s2221 = scalar_lea.sflag [#allocation4], 1
    %2222 = vsyncpa %s2221, 1

</llo_original>
